<compile_context>
chip_gen: v7x
topology: tpu7x:2x2x1
jax: 0.10.0
libtpu: 0.0.40
codegen_flags: <defaults>
</compile_context>

<pallas_src>
import jax
import jax.numpy as jnp
import numpy as np
from jax.experimental import pallas as pl
from jax.experimental.pallas import tpu as pltpu


_FRONT_PAD = 128   # lane-aligned front pad of the flat zero-padded image scratch


# ----------------------------------------------------------------------------
# Kernel 1: 1x1 conv + bias (residual branch), channel-major matmul.
# ----------------------------------------------------------------------------
def _conv1x1_kernel(x_ref, w_ref, b_ref, o_ref):
    # x_ref: (1, Cin, HW); w_ref: (Cout, Cin); b_ref: (Cout, 1); o_ref: (1, Cout, HW)
    y = jnp.dot(w_ref[...], x_ref[0], preferred_element_type=jnp.float32)
    o_ref[0] = y + b_ref[...]


def conv1x1(x, w, b):
    """x: (N, Cin, HW) f32, w: (Cout, Cin) f32, b: (Cout,) f32 -> (N, Cout, HW)."""
    N, Cin, HW = x.shape
    Cout = w.shape[0]
    return pl.pallas_call(
        _conv1x1_kernel,
        out_shape=jax.ShapeDtypeStruct((N, Cout, HW), jnp.float32),
        grid_spec=pltpu.PrefetchScalarGridSpec(
            num_scalar_prefetch=0,
            grid=(N,),
            in_specs=[
                pl.BlockSpec((1, Cin, HW), lambda n: (n, 0, 0)),
                pl.BlockSpec((Cout, Cin), lambda n: (0, 0)),
                pl.BlockSpec((Cout, 1), lambda n: (0, 0)),
            ],
            out_specs=pl.BlockSpec((1, Cout, HW), lambda n: (n, 0, 0))),
        compiler_params=pltpu.CompilerParams(
            dimension_semantics=("parallel",)),
    )(x, w, b.reshape(Cout, 1))


# ----------------------------------------------------------------------------
# Kernel 2: fused [prev-BN affine (+ReLU)] -> 3x3 conv (pad=1, no bias) -> stats.
# ----------------------------------------------------------------------------
def _make_conv3x3_kernel(H, W, Cin, Cout, apply_relu):
    HW = H * W

    def kernel(z_ref, s_ref, t_ref, w_ref, y_ref, ssum_ref, ssq_ref,
               pp_ref, patch_ref):
        # ---- prologue: previous layer's folded BN affine (+ ReLU), in f32 ----
        a = z_ref[0] * s_ref[...] + t_ref[...]            # (Cin, HW)
        if apply_relu:
            a = jnp.maximum(a, 0.0)

        # ---- zero-padded flat image: pp[:, FRONT_PAD + p] = a[:, p] ----------
        pp_ref[...] = jnp.zeros_like(pp_ref)
        pp_ref[:, pl.ds(_FRONT_PAD, HW)] = a              # lane-aligned store

        # ---- im2col: patch[(kh*3+kw)*Cin + ci, p] = a_pad[ci, h+kh-1, w+kw-1]
        col = jax.lax.broadcasted_iota(jnp.int32, (1, HW), 1) % W
        not_left = col != 0            # taps that look one pixel to the left
        not_right = col != (W - 1)     # taps that look one pixel to the right
        for kh in range(3):
            for kw in range(3):
                off = _FRONT_PAD + (kh - 1) * W + (kw - 1)
                tap = pp_ref[:, pl.ds(off, HW)]           # (Cin, HW)
                if kw == 0:
                    tap = jnp.where(not_left, tap, 0.0)
                elif kw == 2:
                    tap = jnp.where(not_right, tap, 0.0)
                patch_ref[pl.ds((kh * 3 + kw) * Cin, Cin), :] = tap

        # ---- one fat MXU matmul: (Cout, 9*Cin) x (9*Cin, HW), bf16 in/f32 acc -
        y = jnp.dot(w_ref[...], patch_ref[...].astype(jnp.bfloat16),
                    preferred_element_type=jnp.float32)   # (Cout, HW) f32
        y_ref[0] = y

        # ---- epilogue: per-(batch, channel) sums for the following BatchNorm -
        ssum_ref[0] = jnp.sum(y, axis=1, keepdims=True)   # (Cout, 1)
        ssq_ref[0] = jnp.sum(y * y, axis=1, keepdims=True)

    return kernel


def conv3x3_fused(z, w_mat, scale, shift, apply_relu, H, W):
    """pre_act = conv3x3(ReLU?(z*scale+shift)), padding=1, no bias.

    z: (N, Cin, H*W) f32; w_mat: (Cout, 9*Cin) bf16.
    Returns (pre_act (N,Cout,HW) f32, ssum (N,Cout,1) f32, ssq (N,Cout,1) f32).
    """
    N, Cin, HW = z.shape
    Cout = w_mat.shape[0]
    hwp = _FRONT_PAD + HW + _FRONT_PAD
    kernel = _make_conv3x3_kernel(H, W, Cin, Cout, apply_relu)
    return pl.pallas_call(
        kernel,
        out_shape=(jax.ShapeDtypeStruct((N, Cout, HW), jnp.float32),
                   jax.ShapeDtypeStruct((N, Cout, 1), jnp.float32),
                   jax.ShapeDtypeStruct((N, Cout, 1), jnp.float32)),
        grid_spec=pltpu.PrefetchScalarGridSpec(
            num_scalar_prefetch=0,
            grid=(N,),
            in_specs=[
                pl.BlockSpec((1, Cin, HW), lambda n: (n, 0, 0)),
                pl.BlockSpec((Cin, 1), lambda n: (0, 0)),
                pl.BlockSpec((Cin, 1), lambda n: (0, 0)),
                pl.BlockSpec((Cout, 9 * Cin), lambda n: (0, 0)),
            ],
            out_specs=[
                pl.BlockSpec((1, Cout, HW), lambda n: (n, 0, 0)),
                pl.BlockSpec((1, Cout, 1), lambda n: (n, 0, 0)),
                pl.BlockSpec((1, Cout, 1), lambda n: (n, 0, 0)),
            ],
            scratch_shapes=[
                pltpu.VMEM((Cin, hwp), jnp.float32),      # zero-padded flat image
                pltpu.VMEM((9 * Cin, HW), jnp.float32),   # im2col patch matrix
            ]),
        compiler_params=pltpu.CompilerParams(
            dimension_semantics=("parallel",)),
    )(z, scale.reshape(Cin, 1), shift.reshape(Cin, 1), w_mat)


# ----------------------------------------------------------------------------
# Kernel 3: final BN affine + ReLU fused with the residual add.
# ----------------------------------------------------------------------------
def _residual_bn_relu_kernel(x1_ref, c_ref, s_ref, t_ref, o_ref):
    o_ref[0] = x1_ref[0] + jnp.maximum(c_ref[0] * s_ref[...] + t_ref[...], 0.0)


def residual_bn_relu(x1, c, scale, shift):
    N, C, HW = x1.shape
    return pl.pallas_call(
        _residual_bn_relu_kernel,
        out_shape=jax.ShapeDtypeStruct((N, C, HW), jnp.float32),
        grid_spec=pltpu.PrefetchScalarGridSpec(
            num_scalar_prefetch=0,
            grid=(N,),
            in_specs=[
                pl.BlockSpec((1, C, HW), lambda n: (n, 0, 0)),
                pl.BlockSpec((1, C, HW), lambda n: (n, 0, 0)),
                pl.BlockSpec((C, 1), lambda n: (0, 0)),
                pl.BlockSpec((C, 1), lambda n: (0, 0)),
            ],
            out_specs=pl.BlockSpec((1, C, HW), lambda n: (n, 0, 0))),
        compiler_params=pltpu.CompilerParams(
            dimension_semantics=("parallel",)),
    )(x1, c, scale.reshape(C, 1), shift.reshape(C, 1))


# ----------------------------------------------------------------------------
# Tiny (C,)-sized glue: finalize training-mode BatchNorm from in-kernel sums.
# ----------------------------------------------------------------------------
def _bn_scale_shift(ssum, ssq, gamma, beta, count, eps=1e-5):
    s = jnp.sum(ssum, axis=0)[:, 0]        # (C,)
    sq = jnp.sum(ssq, axis=0)[:, 0]
    mean = s / count
    var = sq / count - mean * mean         # biased variance (PyTorch normalization)
    scale = gamma * jax.lax.rsqrt(var + eps)
    shift = beta - mean * scale
    return scale, shift


def _pack_conv3x3_weights(w_oihw):
    """(Cout, Cin, 3, 3) OIHW -> (Cout, 9*Cin) bf16 with K index (kh*3+kw)*Cin+ci."""
    Cout, Cin = w_oihw.shape[0], w_oihw.shape[1]
    return jnp.transpose(w_oihw, (0, 2, 3, 1)).reshape(
        Cout, 9 * Cin).astype(jnp.bfloat16)


# ----------------------------------------------------------------------------
# Full RRCNN_block forward.
# ----------------------------------------------------------------------------
def rrcnn_block_forward(x_nchw, params, eps=1e-5):
    N, Cin, H, W = x_nchw.shape
    Cout = params["w1x1"].shape[0]
    HW = H * W
    count = N * HW

    # NCHW is already channel-major: flattening H,W onto the lane axis is free.
    x = x_nchw.reshape(N, Cin, HW).astype(jnp.float32)

    # 1x1 conv (residual branch); bias kept since no BN follows it.
    x1 = conv1x1(x, params["w1x1"].reshape(Cout, Cin).astype(jnp.float32),
                 params["b1x1"])

    wa = _pack_conv3x3_weights(params["w_a"])
    wb = _pack_conv3x3_weights(params["w_b"])
    # NOTE: the 3x3 conv biases (params["b_a"], params["b_b"]) cancel exactly
    # inside training-mode BatchNorm, so they are dropped from the kernel path.

    ones = jnp.ones((Cout,), jnp.float32)
    zeros = jnp.zeros((Cout,), jnp.float32)

    # Recurrent block "a":  RB_a(x1) = CBR_a(2 * CBR_a(x1))
    c1, s1, q1 = conv3x3_fused(x1, wa, ones, zeros, False, H, W)
    sc1, sh1 = _bn_scale_shift(s1, q1, params["g_a"], params["beta_a"], count, eps)
    c2, s2, q2 = conv3x3_fused(c1, wa, 2.0 * sc1, 2.0 * sh1, True, H, W)
    sc2, sh2 = _bn_scale_shift(s2, q2, params["g_a"], params["beta_a"], count, eps)

    # Recurrent block "b":  RB_b(prev) = CBR_b(2 * CBR_b(prev))
    c3, s3, q3 = conv3x3_fused(c2, wb, sc2, sh2, True, H, W)
    sc3, sh3 = _bn_scale_shift(s3, q3, params["g_b"], params["beta_b"], count, eps)
    c4, s4, q4 = conv3x3_fused(c3, wb, 2.0 * sc3, 2.0 * sh3, True, H, W)
    sc4, sh4 = _bn_scale_shift(s4, q4, params["g_b"], params["beta_b"], count, eps)

    # out = x1 + ReLU(BN_b(c4))   (residual add fused with the last BN+ReLU)
    out = residual_bn_relu(x1, c4, sc4, sh4)
    return out.reshape(N, Cout, H, W)

# TODO(synk): BatchNorm2d running_mean/running_var buffer updates (a training-time
# side effect of the PyTorch module) are not produced; only the forward output is.


# ----------------------------------------------------------------------------
# Pure-JAX reference: literal transcription of RRCNN_block.forward.
# The 3x3 convs use bf16 operands / f32 accumulation to match the kernels' MXU
# precision (requested optimization); everything else is f32.
# ----------------------------------------------------------------------------
def _reference_forward(x_nchw, params, eps=1e-5):
    x = x_nchw.astype(jnp.float32)

    def conv1x1_ref(z, w, b):
        y = jax.lax.conv_general_dilated(
            z, w.astype(jnp.float32), (1, 1), "VALID",
            dimension_numbers=("NCHW", "OIHW", "NCHW"))
        return y + b.reshape(1, -1, 1, 1)

    def cbr(z, w, b, g, be):
        y = jax.lax.conv_general_dilated(
            z.astype(jnp.bfloat16), w.astype(jnp.bfloat16), (1, 1),
            ((1, 1), (1, 1)), dimension_numbers=("NCHW", "OIHW", "NCHW"),
            preferred_element_type=jnp.float32)
        y = y + b.reshape(1, -1, 1, 1)           # conv bias (cancels inside BN)
        m = jnp.mean(y, axis=(0, 2, 3), keepdims=True)
        v = jnp.var(y, axis=(0, 2, 3), keepdims=True)
        y = ((y - m) * jax.lax.rsqrt(v + eps) * g.reshape(1, -1, 1, 1)
             + be.reshape(1, -1, 1, 1))
        return jnp.maximum(y, 0.0)

    def recurrent_block(z, w, b, g, be, t=2):
        out = None
        for i in range(t):                       # literal Recurrent_block.forward
            if i == 0:
                z = cbr(z, w, b, g, be)
            out = cbr(z + z, w, b, g, be)
        return out

    x1 = conv1x1_ref(x, params["w1x1"], params["b1x1"])
    x2 = recurrent_block(x1, params["w_a"], params["b_a"],
                         params["g_a"], params["beta_a"])
    x2 = recurrent_block(x2, params["w_b"], params["b_b"],
                         params["g_b"], params["beta_b"])
    return x1 + x2


if __name__ == "__main__":
    # Small shapes consistent with the module: batch=2, in_ch=4, out_ch=8, 16x16.
    N, in_ch, out_ch, H, W = 2, 4, 8, 16, 16

    key = jax.random.PRNGKey(0)
    ks = jax.random.split(key, 10)
    x = jax.random.normal(ks[0], (N, in_ch, H, W), dtype=jnp.float32)

    params = {
        "w1x1": 0.3 * jax.random.normal(ks[1], (out_ch, in_ch, 1, 1), jnp.float32),
        "b1x1": 0.1 * jax.random.normal(ks[2], (out_ch,), jnp.float32),
        "w_a": 0.2 * jax.random.normal(ks[3], (out_ch, out_ch, 3, 3), jnp.float32),
        "b_a": 0.1 * jax.random.normal(ks[4], (out_ch,), jnp.float32),
        "w_b": 0.2 * jax.random.normal(ks[5], (out_ch, out_ch, 3, 3), jnp.float32),
        "b_b": 0.1 * jax.random.normal(ks[6], (out_ch,), jnp.float32),
        "g_a": 1.0 + 0.1 * jax.random.normal(ks[7], (out_ch,), jnp.float32),
        "beta_a": 0.1 * jax.random.normal(ks[8], (out_ch,), jnp.float32),
        "g_b": 1.0 + 0.1 * jax.random.normal(ks[9], (out_ch,), jnp.float32),
        "beta_b": jnp.zeros((out_ch,), jnp.float32),
    }

    out = jax.block_until_ready(jax.jit(rrcnn_block_forward)(x, params))
    ref = jax.block_until_ready(jax.jit(_reference_forward)(x, params))

    assert out.shape == (N, out_ch, H, W), out.shape
    np.testing.assert_allclose(np.asarray(out), np.asarray(ref),
                               rtol=2e-3, atol=2e-3)
    print("KERNEL_OK")
</pallas_src>

<mosaic_0001>
module attributes {stable_mosaic.version = 11 : i64} {
  func.func @_conv1x1_kernel(%arg0: i32, %arg1: memref<1x4x256xf32, #tpu.memory_space<vmem>>, %arg2: memref<8x4xf32, #tpu.memory_space<vmem>>, %arg3: memref<8x1xf32, #tpu.memory_space<vmem>>, %arg4: memref<1x8x256xf32, #tpu.memory_space<vmem>>) attributes {dimension_semantics = [#tpu.dimension_semantics<parallel>], iteration_bounds = array<i64: 2>, scalar_prefetch = 0 : i64, scratch_operands = 0 : i64, tpu.core_type = #tpu.core_type<tc>, window_params = [{transform_indices = @transform_0, window_bounds = array<i64: 1, 4, 256>}, {pipeline_mode = #tpu.pipeline_mode<synchronous>, transform_indices = @transform_1, window_bounds = array<i64: 8, 4>}, {pipeline_mode = #tpu.pipeline_mode<synchronous>, transform_indices = @transform_2, window_bounds = array<i64: 8, 1>}, {transform_indices = @transform_3, window_bounds = array<i64: 1, 8, 256>}]} {
    %c0 = arith.constant 0 : index
    %c0_0 = arith.constant 0 : index
    %0 = vector.load %arg2[%c0, %c0_0] : memref<8x4xf32, #tpu.memory_space<vmem>>, vector<8x4xf32>
    %c0_1 = arith.constant 0 : index
    %c0_2 = arith.constant 0 : index
    %c0_3 = arith.constant 0 : index
    %1 = vector.load %arg1[%c0_1, %c0_2, %c0_3] : memref<1x4x256xf32, #tpu.memory_space<vmem>>, vector<1x4x256xf32>
    %2 = vector.shape_cast %1 : vector<1x4x256xf32> to vector<4x256xf32>
    %cst = arith.constant dense<0.000000e+00> : vector<8x256xf32>
    %3 = tpu.matmul %0, %2, %cst {dimension_numbers = #tpu.dot_dimension_numbers<[1], [0], [0], [1], [0, 0, 1, 1], [], []>} : vector<8x4xf32>, vector<4x256xf32>, vector<8x256xf32> -> vector<8x256xf32>
    %c0_4 = arith.constant 0 : index
    %c0_5 = arith.constant 0 : index
    %4 = vector.load %arg3[%c0_4, %c0_5] : memref<8x1xf32, #tpu.memory_space<vmem>>, vector<8x1xf32>
    %5 = vector.broadcast %4 : vector<8x1xf32> to vector<8x256xf32>
    %6 = arith.addf %3, %5 : vector<8x256xf32>
    %c0_6 = arith.constant 0 : index
    %c0_7 = arith.constant 0 : index
    %c0_8 = arith.constant 0 : index
    %7 = vector.load %arg4[%c0_6, %c0_7, %c0_8] : memref<1x8x256xf32, #tpu.memory_space<vmem>>, vector<1x8x256xf32>
    %8 = vector.shape_cast %7 : vector<1x8x256xf32> to vector<8x256xf32>
    %9 = vector.shape_cast %6 : vector<8x256xf32> to vector<1x8x256xf32>
    tpu.vector_store %arg4[%c0_6, %c0_7, %c0_8], %9 {strides = array<i32>} : memref<1x8x256xf32, #tpu.memory_space<vmem>>, vector<1x8x256xf32>,
    return
  }
  func.func @transform_0(%arg0: i32) -> (i32, i32, i32) {
    %c0_i32 = arith.constant 0 : i32
    %c0_i32_0 = arith.constant 0 : i32
    %c0_i32_1 = arith.constant 0 : i32
    return %arg0, %c0_i32, %c0_i32_0 : i32, i32, i32
  }
  func.func @transform_1(%arg0: i32) -> (i32, i32) {
    %c0_i32 = arith.constant 0 : i32
    %c0_i32_0 = arith.constant 0 : i32
    %c0_i32_1 = arith.constant 0 : i32
    return %c0_i32, %c0_i32_0 : i32, i32
  }
  func.func @transform_2(%arg0: i32) -> (i32, i32) {
    %c0_i32 = arith.constant 0 : i32
    %c0_i32_0 = arith.constant 0 : i32
    %c0_i32_1 = arith.constant 0 : i32
    return %c0_i32, %c0_i32_0 : i32, i32
  }
  func.func @transform_3(%arg0: i32) -> (i32, i32, i32) {
    %c0_i32 = arith.constant 0 : i32
    %c0_i32_0 = arith.constant 0 : i32
    %c0_i32_1 = arith.constant 0 : i32
    return %arg0, %c0_i32, %c0_i32_0 : i32, i32, i32
  }
}

module attributes {stable_mosaic.version = 11 : i64} {
  func.func @kernel(%arg0: i32, %arg1: memref<1x8x256xf32, #tpu.memory_space<vmem>>, %arg2: memref<8x1xf32, #tpu.memory_space<vmem>>, %arg3: memref<8x1xf32, #tpu.memory_space<vmem>>, %arg4: memref<8x72xbf16, #tpu.memory_space<vmem>>, %arg5: memref<1x8x256xf32, #tpu.memory_space<vmem>>, %arg6: memref<1x8x1xf32, #tpu.memory_space<vmem>>, %arg7: memref<1x8x1xf32, #tpu.memory_space<vmem>>, %arg8: memref<8x512xf32, #tpu.memory_space<vmem>>, %arg9: memref<72x256xf32, #tpu.memory_space<vmem>>) attributes {dimension_semantics = [#tpu.dimension_semantics<parallel>], iteration_bounds = array<i64: 2>, scalar_prefetch = 0 : i64, scratch_operands = 2 : i64, tpu.core_type = #tpu.core_type<tc>, window_params = [{transform_indices = @transform_0, window_bounds = array<i64: 1, 8, 256>}, {pipeline_mode = #tpu.pipeline_mode<synchronous>, transform_indices = @transform_1, window_bounds = array<i64: 8, 1>}, {pipeline_mode = #tpu.pipeline_mode<synchronous>, transform_indices = @transform_2, window_bounds = array<i64: 8, 1>}, {pipeline_mode = #tpu.pipeline_mode<synchronous>, transform_indices = @transform_3, window_bounds = array<i64: 8, 72>}, {transform_indices = @transform_4, window_bounds = array<i64: 1, 8, 256>}, {transform_indices = @transform_5, window_bounds = array<i64: 1, 8, 1>}, {transform_indices = @transform_6, window_bounds = array<i64: 1, 8, 1>}]} {
    %c0 = arith.constant 0 : index
    %c0_0 = arith.constant 0 : index
    %c0_1 = arith.constant 0 : index
    %0 = vector.load %arg1[%c0, %c0_0, %c0_1] : memref<1x8x256xf32, #tpu.memory_space<vmem>>, vector<1x8x256xf32>
    %1 = vector.shape_cast %0 : vector<1x8x256xf32> to vector<8x256xf32>
    %c0_2 = arith.constant 0 : index
    %c0_3 = arith.constant 0 : index
    %2 = vector.load %arg2[%c0_2, %c0_3] : memref<8x1xf32, #tpu.memory_space<vmem>>, vector<8x1xf32>
    %3 = vector.broadcast %2 : vector<8x1xf32> to vector<8x256xf32>
    %4 = arith.mulf %1, %3 : vector<8x256xf32>
    %c0_4 = arith.constant 0 : index
    %c0_5 = arith.constant 0 : index
    %5 = vector.load %arg3[%c0_4, %c0_5] : memref<8x1xf32, #tpu.memory_space<vmem>>, vector<8x1xf32>
    %6 = vector.broadcast %5 : vector<8x1xf32> to vector<8x256xf32>
    %7 = arith.addf %4, %6 : vector<8x256xf32>
    %cst = arith.constant 0.000000e+00 : f32
    %8 = vector.broadcast %cst : f32 to vector<8x512xf32>
    %c0_6 = arith.constant 0 : index
    %c0_7 = arith.constant 0 : index
    %9 = vector.load %arg8[%c0_6, %c0_7] : memref<8x512xf32, #tpu.memory_space<vmem>>, vector<8x512xf32>
    tpu.vector_store %arg8[%c0_6, %c0_7], %8 {strides = array<i32>} : memref<8x512xf32, #tpu.memory_space<vmem>>, vector<8x512xf32>,
    %c0_8 = arith.constant 0 : index
    %c128 = arith.constant 128 : index
    %10 = vector.load %arg8[%c0_8, %c128] : memref<8x512xf32, #tpu.memory_space<vmem>>, vector<8x256xf32>
    tpu.vector_store %arg8[%c0_8, %c128], %7 {strides = array<i32>} : memref<8x512xf32, #tpu.memory_space<vmem>>, vector<8x256xf32>,
    %11 = tpu.iota {dimensions = array<i32: 1>} : vector<1x256xi32>
    %c16_i32 = arith.constant 16 : i32
    %c0_i32 = arith.constant 0 : i32
    %12 = arith.cmpi eq, %c16_i32, %c0_i32 : i32
    %c1_i32 = arith.constant 1 : i32
    %13 = arith.select %12, %c1_i32, %c16_i32 : i32
    %14 = vector.broadcast %13 : i32 to vector<1x256xi32>
    %15 = arith.remsi %11, %14 : vector<1x256xi32>
    %c0_i32_9 = arith.constant 0 : i32
    %16 = vector.broadcast %c0_i32_9 : i32 to vector<1x256xi32>
    %17 = arith.cmpi ne, %15, %16 : vector<1x256xi32>
    %c0_i32_10 = arith.constant 0 : i32
    %18 = vector.broadcast %c0_i32_10 : i32 to vector<1x256xi32>
    %19 = arith.cmpi slt, %15, %18 : vector<1x256xi32>
    %c0_i32_11 = arith.constant 0 : i32
    %20 = arith.cmpi slt, %13, %c0_i32_11 : i32
    %21 = vector.broadcast %20 : i1 to vector<1x256xi1>
    %22 = vector.broadcast %21 : vector<1x256xi1> to vector<1x256xi1>
    %23 = arith.xori %19, %22 : vector<1x256xi1>
    %24 = arith.andi %23, %17 : vector<1x256xi1>
    %25 = vector.broadcast %13 : i32 to vector<1x256xi32>
    %26 = arith.addi %15, %25 : vector<1x256xi32>
    %27 = arith.select %24, %26, %15 : vector<1x256xi1>, vector<1x256xi32>
    %c0_i32_12 = arith.constant 0 : i32
    %28 = vector.broadcast %c0_i32_12 : i32 to vector<1x256xi32>
    %29 = arith.cmpi ne, %27, %28 : vector<1x256xi32>
    %c15_i32 = arith.constant 15 : i32
    %30 = vector.broadcast %c15_i32 : i32 to vector<1x256xi32>
    %31 = arith.cmpi ne, %27, %30 : vector<1x256xi32>
    %c0_13 = arith.constant 0 : index
    %c111 = arith.constant 111 : index
    %32 = vector.load %arg8[%c0_13, %c111] : memref<8x512xf32, #tpu.memory_space<vmem>>, vector<8x256xf32>
    %cst_14 = arith.constant 0.000000e+00 : f32
    %33 = vector.shape_cast %29 : vector<1x256xi1> to vector<1x256xi1>
    %34 = vector.broadcast %33 : vector<1x256xi1> to vector<8x256xi1>
    %35 = vector.broadcast %cst_14 : f32 to vector<8x256xf32>
    %36 = arith.select %34, %32, %35 : vector<8x256xi1>, vector<8x256xf32>
    %c0_15 = arith.constant 0 : index
    %c0_16 = arith.constant 0 : index
    %37 = vector.load %arg9[%c0_15, %c0_16] : memref<72x256xf32, #tpu.memory_space<vmem>>, vector<8x256xf32>
    tpu.vector_store %arg9[%c0_15, %c0_16], %36 {strides = array<i32>} : memref<72x256xf32, #tpu.memory_space<vmem>>, vector<8x256xf32>,
    %c0_17 = arith.constant 0 : index
    %c112 = arith.constant 112 : index
    %38 = vector.load %arg8[%c0_17, %c112] : memref<8x512xf32, #tpu.memory_space<vmem>>, vector<8x256xf32>
    %c8 = arith.constant 8 : index
    %c0_18 = arith.constant 0 : index
    %39 = vector.load %arg9[%c8, %c0_18] : memref<72x256xf32, #tpu.memory_space<vmem>>, vector<8x256xf32>
    tpu.vector_store %arg9[%c8, %c0_18], %38 {strides = array<i32>} : memref<72x256xf32, #tpu.memory_space<vmem>>, vector<8x256xf32>,
    %c0_19 = arith.constant 0 : index
    %c113 = arith.constant 113 : index
    %40 = vector.load %arg8[%c0_19, %c113] : memref<8x512xf32, #tpu.memory_space<vmem>>, vector<8x256xf32>
    %cst_20 = arith.constant 0.000000e+00 : f32
    %41 = vector.shape_cast %31 : vector<1x256xi1> to vector<1x256xi1>
    %42 = vector.broadcast %41 : vector<1x256xi1> to vector<8x256xi1>
    %43 = vector.broadcast %cst_20 : f32 to vector<8x256xf32>
    %44 = arith.select %42, %40, %43 : vector<8x256xi1>, vector<8x256xf32>
    %c16 = arith.constant 16 : index
    %c0_21 = arith.constant 0 : index
    %45 = vector.load %arg9[%c16, %c0_21] : memref<72x256xf32, #tpu.memory_space<vmem>>, vector<8x256xf32>
    tpu.vector_store %arg9[%c16, %c0_21], %44 {strides = array<i32>} : memref<72x256xf32, #tpu.memory_space<vmem>>, vector<8x256xf32>,
    %c0_22 = arith.constant 0 : index
    %c127 = arith.constant 127 : index
    %46 = vector.load %arg8[%c0_22, %c127] : memref<8x512xf32, #tpu.memory_space<vmem>>, vector<8x256xf32>
    %cst_23 = arith.constant 0.000000e+00 : f32
    %47 = vector.shape_cast %29 : vector<1x256xi1> to vector<1x256xi1>
    %48 = vector.broadcast %47 : vector<1x256xi1> to vector<8x256xi1>
    %49 = vector.broadcast %cst_23 : f32 to vector<8x256xf32>
    %50 = arith.select %48, %46, %49 : vector<8x256xi1>, vector<8x256xf32>
    %c24 = arith.constant 24 : index
    %c0_24 = arith.constant 0 : index
    %51 = vector.load %arg9[%c24, %c0_24] : memref<72x256xf32, #tpu.memory_space<vmem>>, vector<8x256xf32>
    tpu.vector_store %arg9[%c24, %c0_24], %50 {strides = array<i32>} : memref<72x256xf32, #tpu.memory_space<vmem>>, vector<8x256xf32>,
    %c0_25 = arith.constant 0 : index
    %c128_26 = arith.constant 128 : index
    %52 = vector.load %arg8[%c0_25, %c128_26] : memref<8x512xf32, #tpu.memory_space<vmem>>, vector<8x256xf32>
    %c32 = arith.constant 32 : index
    %c0_27 = arith.constant 0 : index
    %53 = vector.load %arg9[%c32, %c0_27] : memref<72x256xf32, #tpu.memory_space<vmem>>, vector<8x256xf32>
    tpu.vector_store %arg9[%c32, %c0_27], %52 {strides = array<i32>} : memref<72x256xf32, #tpu.memory_space<vmem>>, vector<8x256xf32>,
    %c0_28 = arith.constant 0 : index
    %c129 = arith.constant 129 : index
    %54 = vector.load %arg8[%c0_28, %c129] : memref<8x512xf32, #tpu.memory_space<vmem>>, vector<8x256xf32>
    %cst_29 = arith.constant 0.000000e+00 : f32
    %55 = vector.shape_cast %31 : vector<1x256xi1> to vector<1x256xi1>
    %56 = vector.broadcast %55 : vector<1x256xi1> to vector<8x256xi1>
    %57 = vector.broadcast %cst_29 : f32 to vector<8x256xf32>
    %58 = arith.select %56, %54, %57 : vector<8x256xi1>, vector<8x256xf32>
    %c40 = arith.constant 40 : index
    %c0_30 = arith.constant 0 : index
    %59 = vector.load %arg9[%c40, %c0_30] : memref<72x256xf32, #tpu.memory_space<vmem>>, vector<8x256xf32>
    tpu.vector_store %arg9[%c40, %c0_30], %58 {strides = array<i32>} : memref<72x256xf32, #tpu.memory_space<vmem>>, vector<8x256xf32>,
    %c0_31 = arith.constant 0 : index
    %c143 = arith.constant 143 : index
    %60 = vector.load %arg8[%c0_31, %c143] : memref<8x512xf32, #tpu.memory_space<vmem>>, vector<8x256xf32>
    %cst_32 = arith.constant 0.000000e+00 : f32
    %61 = vector.shape_cast %29 : vector<1x256xi1> to vector<1x256xi1>
    %62 = vector.broadcast %61 : vector<1x256xi1> to vector<8x256xi1>
    %63 = vector.broadcast %cst_32 : f32 to vector<8x256xf32>
    %64 = arith.select %62, %60, %63 : vector<8x256xi1>, vector<8x256xf32>
    %c48 = arith.constant 48 : index
    %c0_33 = arith.constant 0 : index
    %65 = vector.load %arg9[%c48, %c0_33] : memref<72x256xf32, #tpu.memory_space<vmem>>, vector<8x256xf32>
    tpu.vector_store %arg9[%c48, %c0_33], %64 {strides = array<i32>} : memref<72x256xf32, #tpu.memory_space<vmem>>, vector<8x256xf32>,
    %c0_34 = arith.constant 0 : index
    %c144 = arith.constant 144 : index
    %66 = vector.load %arg8[%c0_34, %c144] : memref<8x512xf32, #tpu.memory_space<vmem>>, vector<8x256xf32>
    %c56 = arith.constant 56 : index
    %c0_35 = arith.constant 0 : index
    %67 = vector.load %arg9[%c56, %c0_35] : memref<72x256xf32, #tpu.memory_space<vmem>>, vector<8x256xf32>
    tpu.vector_store %arg9[%c56, %c0_35], %66 {strides = array<i32>} : memref<72x256xf32, #tpu.memory_space<vmem>>, vector<8x256xf32>,
    %c0_36 = arith.constant 0 : index
    %c145 = arith.constant 145 : index
    %68 = vector.load %arg8[%c0_36, %c145] : memref<8x512xf32, #tpu.memory_space<vmem>>, vector<8x256xf32>
    %cst_37 = arith.constant 0.000000e+00 : f32
    %69 = vector.shape_cast %31 : vector<1x256xi1> to vector<1x256xi1>
    %70 = vector.broadcast %69 : vector<1x256xi1> to vector<8x256xi1>
    %71 = vector.broadcast %cst_37 : f32 to vector<8x256xf32>
    %72 = arith.select %70, %68, %71 : vector<8x256xi1>, vector<8x256xf32>
    %c64 = arith.constant 64 : index
    %c0_38 = arith.constant 0 : index
    %73 = vector.load %arg9[%c64, %c0_38] : memref<72x256xf32, #tpu.memory_space<vmem>>, vector<8x256xf32>
    tpu.vector_store %arg9[%c64, %c0_38], %72 {strides = array<i32>} : memref<72x256xf32, #tpu.memory_space<vmem>>, vector<8x256xf32>,
    %c0_39 = arith.constant 0 : index
    %c0_40 = arith.constant 0 : index
    %74 = vector.load %arg4[%c0_39, %c0_40] : memref<8x72xbf16, #tpu.memory_space<vmem>>, vector<8x72xbf16>
    %c0_41 = arith.constant 0 : index
    %c0_42 = arith.constant 0 : index
    %75 = vector.load %arg9[%c0_41, %c0_42] : memref<72x256xf32, #tpu.memory_space<vmem>>, vector<72x256xf32>
    %76 = arith.truncf %75 : vector<72x256xf32> to vector<72x256xbf16>
    %cst_43 = arith.constant dense<0.000000e+00> : vector<8x256xf32>
    %77 = tpu.matmul %74, %76, %cst_43 {dimension_numbers = #tpu.dot_dimension_numbers<[1], [0], [0], [1], [0, 0, 1, 1], [], []>} : vector<8x72xbf16>, vector<72x256xbf16>, vector<8x256xf32> -> vector<8x256xf32>
    %c0_44 = arith.constant 0 : index
    %c0_45 = arith.constant 0 : index
    %c0_46 = arith.constant 0 : index
    %78 = vector.load %arg5[%c0_44, %c0_45, %c0_46] : memref<1x8x256xf32, #tpu.memory_space<vmem>>, vector<1x8x256xf32>
    %79 = vector.shape_cast %78 : vector<1x8x256xf32> to vector<8x256xf32>
    %80 = vector.shape_cast %77 : vector<8x256xf32> to vector<1x8x256xf32>
    tpu.vector_store %arg5[%c0_44, %c0_45, %c0_46], %80 {strides = array<i32>} : memref<1x8x256xf32, #tpu.memory_space<vmem>>, vector<1x8x256xf32>,
    %cst_47 = arith.constant dense<0.000000e+00> : vector<8xf32>
    %81 = vector.multi_reduction <add>, %77, %cst_47 [1] : vector<8x256xf32> to vector<8xf32>
    %82 = vector.shape_cast %81 : vector<8xf32> to vector<8x1xf32>
    %c0_48 = arith.constant 0 : index
    %c0_49 = arith.constant 0 : index
    %c0_50 = arith.constant 0 : index
    %83 = vector.load %arg6[%c0_48, %c0_49, %c0_50] : memref<1x8x1xf32, #tpu.memory_space<vmem>>, vector<1x8x1xf32>
    %84 = vector.shape_cast %83 : vector<1x8x1xf32> to vector<8x1xf32>
    %85 = vector.shape_cast %82 : vector<8x1xf32> to vector<1x8x1xf32>
    tpu.vector_store %arg6[%c0_48, %c0_49, %c0_50], %85 {strides = array<i32>} : memref<1x8x1xf32, #tpu.memory_space<vmem>>, vector<1x8x1xf32>,
    %86 = arith.mulf %77, %77 : vector<8x256xf32>
    %cst_51 = arith.constant dense<0.000000e+00> : vector<8xf32>
    %87 = vector.multi_reduction <add>, %86, %cst_51 [1] : vector<8x256xf32> to vector<8xf32>
    %88 = vector.shape_cast %87 : vector<8xf32> to vector<8x1xf32>
    %c0_52 = arith.constant 0 : index
    %c0_53 = arith.constant 0 : index
    %c0_54 = arith.constant 0 : index
    %89 = vector.load %arg7[%c0_52, %c0_53, %c0_54] : memref<1x8x1xf32, #tpu.memory_space<vmem>>, vector<1x8x1xf32>
    %90 = vector.shape_cast %89 : vector<1x8x1xf32> to vector<8x1xf32>
    %91 = vector.shape_cast %88 : vector<8x1xf32> to vector<1x8x1xf32>
    tpu.vector_store %arg7[%c0_52, %c0_53, %c0_54], %91 {strides = array<i32>} : memref<1x8x1xf32, #tpu.memory_space<vmem>>, vector<1x8x1xf32>,
    return
  }
  func.func @transform_0(%arg0: i32) -> (i32, i32, i32) {
    %c0_i32 = arith.constant 0 : i32
    %c0_i32_0 = arith.constant 0 : i32
    %c0_i32_1 = arith.constant 0 : i32
    return %arg0, %c0_i32, %c0_i32_0 : i32, i32, i32
  }
  func.func @transform_1(%arg0: i32) -> (i32, i32) {
    %c0_i32 = arith.constant 0 : i32
    %c0_i32_0 = arith.constant 0 : i32
    %c0_i32_1 = arith.constant 0 : i32
    return %c0_i32, %c0_i32_0 : i32, i32
  }
  func.func @transform_2(%arg0: i32) -> (i32, i32) {
    %c0_i32 = arith.constant 0 : i32
    %c0_i32_0 = arith.constant 0 : i32
    %c0_i32_1 = arith.constant 0 : i32
    return %c0_i32, %c0_i32_0 : i32, i32
  }
  func.func @transform_3(%arg0: i32) -> (i32, i32) {
    %c0_i32 = arith.constant 0 : i32
    %c0_i32_0 = arith.constant 0 : i32
    %c0_i32_1 = arith.constant 0 : i32
    return %c0_i32, %c0_i32_0 : i32, i32
  }
  func.func @transform_4(%arg0: i32) -> (i32, i32, i32) {
    %c0_i32 = arith.constant 0 : i32
    %c0_i32_0 = arith.constant 0 : i32
    %c0_i32_1 = arith.constant 0 : i32
    return %arg0, %c0_i32, %c0_i32_0 : i32, i32, i32
  }
  func.func @transform_5(%arg0: i32) -> (i32, i32, i32) {
    %c0_i32 = arith.constant 0 : i32
    %c0_i32_0 = arith.constant 0 : i32
    %c0_i32_1 = arith.constant 0 : i32
    return %arg0, %c0_i32, %c0_i32_0 : i32, i32, i32
  }
  func.func @transform_6(%arg0: i32) -> (i32, i32, i32) {
    %c0_i32 = arith.constant 0 : i32
    %c0_i32_0 = arith.constant 0 : i32
    %c0_i32_1 = arith.constant 0 : i32
    return %arg0, %c0_i32, %c0_i32_0 : i32, i32, i32
  }
}

module attributes {stable_mosaic.version = 11 : i64} {
  func.func @kernel(%arg0: i32, %arg1: memref<1x8x256xf32, #tpu.memory_space<vmem>>, %arg2: memref<8x1xf32, #tpu.memory_space<vmem>>, %arg3: memref<8x1xf32, #tpu.memory_space<vmem>>, %arg4: memref<8x72xbf16, #tpu.memory_space<vmem>>, %arg5: memref<1x8x256xf32, #tpu.memory_space<vmem>>, %arg6: memref<1x8x1xf32, #tpu.memory_space<vmem>>, %arg7: memref<1x8x1xf32, #tpu.memory_space<vmem>>, %arg8: memref<8x512xf32, #tpu.memory_space<vmem>>, %arg9: memref<72x256xf32, #tpu.memory_space<vmem>>) attributes {dimension_semantics = [#tpu.dimension_semantics<parallel>], iteration_bounds = array<i64: 2>, scalar_prefetch = 0 : i64, scratch_operands = 2 : i64, tpu.core_type = #tpu.core_type<tc>, window_params = [{transform_indices = @transform_0, window_bounds = array<i64: 1, 8, 256>}, {pipeline_mode = #tpu.pipeline_mode<synchronous>, transform_indices = @transform_1, window_bounds = array<i64: 8, 1>}, {pipeline_mode = #tpu.pipeline_mode<synchronous>, transform_indices = @transform_2, window_bounds = array<i64: 8, 1>}, {pipeline_mode = #tpu.pipeline_mode<synchronous>, transform_indices = @transform_3, window_bounds = array<i64: 8, 72>}, {transform_indices = @transform_4, window_bounds = array<i64: 1, 8, 256>}, {transform_indices = @transform_5, window_bounds = array<i64: 1, 8, 1>}, {transform_indices = @transform_6, window_bounds = array<i64: 1, 8, 1>}]} {
    %c0 = arith.constant 0 : index
    %c0_0 = arith.constant 0 : index
    %c0_1 = arith.constant 0 : index
    %0 = vector.load %arg1[%c0, %c0_0, %c0_1] : memref<1x8x256xf32, #tpu.memory_space<vmem>>, vector<1x8x256xf32>
    %1 = vector.shape_cast %0 : vector<1x8x256xf32> to vector<8x256xf32>
    %c0_2 = arith.constant 0 : index
    %c0_3 = arith.constant 0 : index
    %2 = vector.load %arg2[%c0_2, %c0_3] : memref<8x1xf32, #tpu.memory_space<vmem>>, vector<8x1xf32>
    %3 = vector.broadcast %2 : vector<8x1xf32> to vector<8x256xf32>
    %4 = arith.mulf %1, %3 : vector<8x256xf32>
    %c0_4 = arith.constant 0 : index
    %c0_5 = arith.constant 0 : index
    %5 = vector.load %arg3[%c0_4, %c0_5] : memref<8x1xf32, #tpu.memory_space<vmem>>, vector<8x1xf32>
    %6 = vector.broadcast %5 : vector<8x1xf32> to vector<8x256xf32>
    %7 = arith.addf %4, %6 : vector<8x256xf32>
    %cst = arith.constant 0.000000e+00 : f32
    %8 = vector.broadcast %cst : f32 to vector<8x256xf32>
    %9 = arith.maximumf %7, %8 : vector<8x256xf32>
    %cst_6 = arith.constant 0.000000e+00 : f32
    %10 = vector.broadcast %cst_6 : f32 to vector<8x512xf32>
    %c0_7 = arith.constant 0 : index
    %c0_8 = arith.constant 0 : index
    %11 = vector.load %arg8[%c0_7, %c0_8] : memref<8x512xf32, #tpu.memory_space<vmem>>, vector<8x512xf32>
    tpu.vector_store %arg8[%c0_7, %c0_8], %10 {strides = array<i32>} : memref<8x512xf32, #tpu.memory_space<vmem>>, vector<8x512xf32>,
    %c0_9 = arith.constant 0 : index
    %c128 = arith.constant 128 : index
    %12 = vector.load %arg8[%c0_9, %c128] : memref<8x512xf32, #tpu.memory_space<vmem>>, vector<8x256xf32>
    tpu.vector_store %arg8[%c0_9, %c128], %9 {strides = array<i32>} : memref<8x512xf32, #tpu.memory_space<vmem>>, vector<8x256xf32>,
    %13 = tpu.iota {dimensions = array<i32: 1>} : vector<1x256xi32>
    %c16_i32 = arith.constant 16 : i32
    %c0_i32 = arith.constant 0 : i32
    %14 = arith.cmpi eq, %c16_i32, %c0_i32 : i32
    %c1_i32 = arith.constant 1 : i32
    %15 = arith.select %14, %c1_i32, %c16_i32 : i32
    %16 = vector.broadcast %15 : i32 to vector<1x256xi32>
    %17 = arith.remsi %13, %16 : vector<1x256xi32>
    %c0_i32_10 = arith.constant 0 : i32
    %18 = vector.broadcast %c0_i32_10 : i32 to vector<1x256xi32>
    %19 = arith.cmpi ne, %17, %18 : vector<1x256xi32>
    %c0_i32_11 = arith.constant 0 : i32
    %20 = vector.broadcast %c0_i32_11 : i32 to vector<1x256xi32>
    %21 = arith.cmpi slt, %17, %20 : vector<1x256xi32>
    %c0_i32_12 = arith.constant 0 : i32
    %22 = arith.cmpi slt, %15, %c0_i32_12 : i32
    %23 = vector.broadcast %22 : i1 to vector<1x256xi1>
    %24 = vector.broadcast %23 : vector<1x256xi1> to vector<1x256xi1>
    %25 = arith.xori %21, %24 : vector<1x256xi1>
    %26 = arith.andi %25, %19 : vector<1x256xi1>
    %27 = vector.broadcast %15 : i32 to vector<1x256xi32>
    %28 = arith.addi %17, %27 : vector<1x256xi32>
    %29 = arith.select %26, %28, %17 : vector<1x256xi1>, vector<1x256xi32>
    %c0_i32_13 = arith.constant 0 : i32
    %30 = vector.broadcast %c0_i32_13 : i32 to vector<1x256xi32>
    %31 = arith.cmpi ne, %29, %30 : vector<1x256xi32>
    %c15_i32 = arith.constant 15 : i32
    %32 = vector.broadcast %c15_i32 : i32 to vector<1x256xi32>
    %33 = arith.cmpi ne, %29, %32 : vector<1x256xi32>
    %c0_14 = arith.constant 0 : index
    %c111 = arith.constant 111 : index
    %34 = vector.load %arg8[%c0_14, %c111] : memref<8x512xf32, #tpu.memory_space<vmem>>, vector<8x256xf32>
    %cst_15 = arith.constant 0.000000e+00 : f32
    %35 = vector.shape_cast %31 : vector<1x256xi1> to vector<1x256xi1>
    %36 = vector.broadcast %35 : vector<1x256xi1> to vector<8x256xi1>
    %37 = vector.broadcast %cst_15 : f32 to vector<8x256xf32>
    %38 = arith.select %36, %34, %37 : vector<8x256xi1>, vector<8x256xf32>
    %c0_16 = arith.constant 0 : index
    %c0_17 = arith.constant 0 : index
    %39 = vector.load %arg9[%c0_16, %c0_17] : memref<72x256xf32, #tpu.memory_space<vmem>>, vector<8x256xf32>
    tpu.vector_store %arg9[%c0_16, %c0_17], %38 {strides = array<i32>} : memref<72x256xf32, #tpu.memory_space<vmem>>, vector<8x256xf32>,
    %c0_18 = arith.constant 0 : index
    %c112 = arith.constant 112 : index
    %40 = vector.load %arg8[%c0_18, %c112] : memref<8x512xf32, #tpu.memory_space<vmem>>, vector<8x256xf32>
    %c8 = arith.constant 8 : index
    %c0_19 = arith.constant 0 : index
    %41 = vector.load %arg9[%c8, %c0_19] : memref<72x256xf32, #tpu.memory_space<vmem>>, vector<8x256xf32>
    tpu.vector_store %arg9[%c8, %c0_19], %40 {strides = array<i32>} : memref<72x256xf32, #tpu.memory_space<vmem>>, vector<8x256xf32>,
    %c0_20 = arith.constant 0 : index
    %c113 = arith.constant 113 : index
    %42 = vector.load %arg8[%c0_20, %c113] : memref<8x512xf32, #tpu.memory_space<vmem>>, vector<8x256xf32>
    %cst_21 = arith.constant 0.000000e+00 : f32
    %43 = vector.shape_cast %33 : vector<1x256xi1> to vector<1x256xi1>
    %44 = vector.broadcast %43 : vector<1x256xi1> to vector<8x256xi1>
    %45 = vector.broadcast %cst_21 : f32 to vector<8x256xf32>
    %46 = arith.select %44, %42, %45 : vector<8x256xi1>, vector<8x256xf32>
    %c16 = arith.constant 16 : index
    %c0_22 = arith.constant 0 : index
    %47 = vector.load %arg9[%c16, %c0_22] : memref<72x256xf32, #tpu.memory_space<vmem>>, vector<8x256xf32>
    tpu.vector_store %arg9[%c16, %c0_22], %46 {strides = array<i32>} : memref<72x256xf32, #tpu.memory_space<vmem>>, vector<8x256xf32>,
    %c0_23 = arith.constant 0 : index
    %c127 = arith.constant 127 : index
    %48 = vector.load %arg8[%c0_23, %c127] : memref<8x512xf32, #tpu.memory_space<vmem>>, vector<8x256xf32>
    %cst_24 = arith.constant 0.000000e+00 : f32
    %49 = vector.shape_cast %31 : vector<1x256xi1> to vector<1x256xi1>
    %50 = vector.broadcast %49 : vector<1x256xi1> to vector<8x256xi1>
    %51 = vector.broadcast %cst_24 : f32 to vector<8x256xf32>
    %52 = arith.select %50, %48, %51 : vector<8x256xi1>, vector<8x256xf32>
    %c24 = arith.constant 24 : index
    %c0_25 = arith.constant 0 : index
    %53 = vector.load %arg9[%c24, %c0_25] : memref<72x256xf32, #tpu.memory_space<vmem>>, vector<8x256xf32>
    tpu.vector_store %arg9[%c24, %c0_25], %52 {strides = array<i32>} : memref<72x256xf32, #tpu.memory_space<vmem>>, vector<8x256xf32>,
    %c0_26 = arith.constant 0 : index
    %c128_27 = arith.constant 128 : index
    %54 = vector.load %arg8[%c0_26, %c128_27] : memref<8x512xf32, #tpu.memory_space<vmem>>, vector<8x256xf32>
    %c32 = arith.constant 32 : index
    %c0_28 = arith.constant 0 : index
    %55 = vector.load %arg9[%c32, %c0_28] : memref<72x256xf32, #tpu.memory_space<vmem>>, vector<8x256xf32>
    tpu.vector_store %arg9[%c32, %c0_28], %54 {strides = array<i32>} : memref<72x256xf32, #tpu.memory_space<vmem>>, vector<8x256xf32>,
    %c0_29 = arith.constant 0 : index
    %c129 = arith.constant 129 : index
    %56 = vector.load %arg8[%c0_29, %c129] : memref<8x512xf32, #tpu.memory_space<vmem>>, vector<8x256xf32>
    %cst_30 = arith.constant 0.000000e+00 : f32
    %57 = vector.shape_cast %33 : vector<1x256xi1> to vector<1x256xi1>
    %58 = vector.broadcast %57 : vector<1x256xi1> to vector<8x256xi1>
    %59 = vector.broadcast %cst_30 : f32 to vector<8x256xf32>
    %60 = arith.select %58, %56, %59 : vector<8x256xi1>, vector<8x256xf32>
    %c40 = arith.constant 40 : index
    %c0_31 = arith.constant 0 : index
    %61 = vector.load %arg9[%c40, %c0_31] : memref<72x256xf32, #tpu.memory_space<vmem>>, vector<8x256xf32>
    tpu.vector_store %arg9[%c40, %c0_31], %60 {strides = array<i32>} : memref<72x256xf32, #tpu.memory_space<vmem>>, vector<8x256xf32>,
    %c0_32 = arith.constant 0 : index
    %c143 = arith.constant 143 : index
    %62 = vector.load %arg8[%c0_32, %c143] : memref<8x512xf32, #tpu.memory_space<vmem>>, vector<8x256xf32>
    %cst_33 = arith.constant 0.000000e+00 : f32
    %63 = vector.shape_cast %31 : vector<1x256xi1> to vector<1x256xi1>
    %64 = vector.broadcast %63 : vector<1x256xi1> to vector<8x256xi1>
    %65 = vector.broadcast %cst_33 : f32 to vector<8x256xf32>
    %66 = arith.select %64, %62, %65 : vector<8x256xi1>, vector<8x256xf32>
    %c48 = arith.constant 48 : index
    %c0_34 = arith.constant 0 : index
    %67 = vector.load %arg9[%c48, %c0_34] : memref<72x256xf32, #tpu.memory_space<vmem>>, vector<8x256xf32>
    tpu.vector_store %arg9[%c48, %c0_34], %66 {strides = array<i32>} : memref<72x256xf32, #tpu.memory_space<vmem>>, vector<8x256xf32>,
    %c0_35 = arith.constant 0 : index
    %c144 = arith.constant 144 : index
    %68 = vector.load %arg8[%c0_35, %c144] : memref<8x512xf32, #tpu.memory_space<vmem>>, vector<8x256xf32>
    %c56 = arith.constant 56 : index
    %c0_36 = arith.constant 0 : index
    %69 = vector.load %arg9[%c56, %c0_36] : memref<72x256xf32, #tpu.memory_space<vmem>>, vector<8x256xf32>
    tpu.vector_store %arg9[%c56, %c0_36], %68 {strides = array<i32>} : memref<72x256xf32, #tpu.memory_space<vmem>>, vector<8x256xf32>,
    %c0_37 = arith.constant 0 : index
    %c145 = arith.constant 145 : index
    %70 = vector.load %arg8[%c0_37, %c145] : memref<8x512xf32, #tpu.memory_space<vmem>>, vector<8x256xf32>
    %cst_38 = arith.constant 0.000000e+00 : f32
    %71 = vector.shape_cast %33 : vector<1x256xi1> to vector<1x256xi1>
    %72 = vector.broadcast %71 : vector<1x256xi1> to vector<8x256xi1>
    %73 = vector.broadcast %cst_38 : f32 to vector<8x256xf32>
    %74 = arith.select %72, %70, %73 : vector<8x256xi1>, vector<8x256xf32>
    %c64 = arith.constant 64 : index
    %c0_39 = arith.constant 0 : index
    %75 = vector.load %arg9[%c64, %c0_39] : memref<72x256xf32, #tpu.memory_space<vmem>>, vector<8x256xf32>
    tpu.vector_store %arg9[%c64, %c0_39], %74 {strides = array<i32>} : memref<72x256xf32, #tpu.memory_space<vmem>>, vector<8x256xf32>,
    %c0_40 = arith.constant 0 : index
    %c0_41 = arith.constant 0 : index
    %76 = vector.load %arg4[%c0_40, %c0_41] : memref<8x72xbf16, #tpu.memory_space<vmem>>, vector<8x72xbf16>
    %c0_42 = arith.constant 0 : index
    %c0_43 = arith.constant 0 : index
    %77 = vector.load %arg9[%c0_42, %c0_43] : memref<72x256xf32, #tpu.memory_space<vmem>>, vector<72x256xf32>
    %78 = arith.truncf %77 : vector<72x256xf32> to vector<72x256xbf16>
    %cst_44 = arith.constant dense<0.000000e+00> : vector<8x256xf32>
    %79 = tpu.matmul %76, %78, %cst_44 {dimension_numbers = #tpu.dot_dimension_numbers<[1], [0], [0], [1], [0, 0, 1, 1], [], []>} : vector<8x72xbf16>, vector<72x256xbf16>, vector<8x256xf32> -> vector<8x256xf32>
    %c0_45 = arith.constant 0 : index
    %c0_46 = arith.constant 0 : index
    %c0_47 = arith.constant 0 : index
    %80 = vector.load %arg5[%c0_45, %c0_46, %c0_47] : memref<1x8x256xf32, #tpu.memory_space<vmem>>, vector<1x8x256xf32>
    %81 = vector.shape_cast %80 : vector<1x8x256xf32> to vector<8x256xf32>
    %82 = vector.shape_cast %79 : vector<8x256xf32> to vector<1x8x256xf32>
    tpu.vector_store %arg5[%c0_45, %c0_46, %c0_47], %82 {strides = array<i32>} : memref<1x8x256xf32, #tpu.memory_space<vmem>>, vector<1x8x256xf32>,
    %cst_48 = arith.constant dense<0.000000e+00> : vector<8xf32>
    %83 = vector.multi_reduction <add>, %79, %cst_48 [1] : vector<8x256xf32> to vector<8xf32>
    %84 = vector.shape_cast %83 : vector<8xf32> to vector<8x1xf32>
    %c0_49 = arith.constant 0 : index
    %c0_50 = arith.constant 0 : index
    %c0_51 = arith.constant 0 : index
    %85 = vector.load %arg6[%c0_49, %c0_50, %c0_51] : memref<1x8x1xf32, #tpu.memory_space<vmem>>, vector<1x8x1xf32>
    %86 = vector.shape_cast %85 : vector<1x8x1xf32> to vector<8x1xf32>
    %87 = vector.shape_cast %84 : vector<8x1xf32> to vector<1x8x1xf32>
    tpu.vector_store %arg6[%c0_49, %c0_50, %c0_51], %87 {strides = array<i32>} : memref<1x8x1xf32, #tpu.memory_space<vmem>>, vector<1x8x1xf32>,
    %88 = arith.mulf %79, %79 : vector<8x256xf32>
    %cst_52 = arith.constant dense<0.000000e+00> : vector<8xf32>
    %89 = vector.multi_reduction <add>, %88, %cst_52 [1] : vector<8x256xf32> to vector<8xf32>
    %90 = vector.shape_cast %89 : vector<8xf32> to vector<8x1xf32>
    %c0_53 = arith.constant 0 : index
    %c0_54 = arith.constant 0 : index
    %c0_55 = arith.constant 0 : index
    %91 = vector.load %arg7[%c0_53, %c0_54, %c0_55] : memref<1x8x1xf32, #tpu.memory_space<vmem>>, vector<1x8x1xf32>
    %92 = vector.shape_cast %91 : vector<1x8x1xf32> to vector<8x1xf32>
    %93 = vector.shape_cast %90 : vector<8x1xf32> to vector<1x8x1xf32>
    tpu.vector_store %arg7[%c0_53, %c0_54, %c0_55], %93 {strides = array<i32>} : memref<1x8x1xf32, #tpu.memory_space<vmem>>, vector<1x8x1xf32>,
    return
  }
  func.func @transform_0(%arg0: i32) -> (i32, i32, i32) {
    %c0_i32 = arith.constant 0 : i32
    %c0_i32_0 = arith.constant 0 : i32
    %c0_i32_1 = arith.constant 0 : i32
    return %arg0, %c0_i32, %c0_i32_0 : i32, i32, i32
  }
  func.func @transform_1(%arg0: i32) -> (i32, i32) {
    %c0_i32 = arith.constant 0 : i32
    %c0_i32_0 = arith.constant 0 : i32
    %c0_i32_1 = arith.constant 0 : i32
    return %c0_i32, %c0_i32_0 : i32, i32
  }
  func.func @transform_2(%arg0: i32) -> (i32, i32) {
    %c0_i32 = arith.constant 0 : i32
    %c0_i32_0 = arith.constant 0 : i32
    %c0_i32_1 = arith.constant 0 : i32
    return %c0_i32, %c0_i32_0 : i32, i32
  }
  func.func @transform_3(%arg0: i32) -> (i32, i32) {
    %c0_i32 = arith.constant 0 : i32
    %c0_i32_0 = arith.constant 0 : i32
    %c0_i32_1 = arith.constant 0 : i32
    return %c0_i32, %c0_i32_0 : i32, i32
  }
  func.func @transform_4(%arg0: i32) -> (i32, i32, i32) {
    %c0_i32 = arith.constant 0 : i32
    %c0_i32_0 = arith.constant 0 : i32
    %c0_i32_1 = arith.constant 0 : i32
    return %arg0, %c0_i32, %c0_i32_0 : i32, i32, i32
  }
  func.func @transform_5(%arg0: i32) -> (i32, i32, i32) {
    %c0_i32 = arith.constant 0 : i32
    %c0_i32_0 = arith.constant 0 : i32
    %c0_i32_1 = arith.constant 0 : i32
    return %arg0, %c0_i32, %c0_i32_0 : i32, i32, i32
  }
  func.func @transform_6(%arg0: i32) -> (i32, i32, i32) {
    %c0_i32 = arith.constant 0 : i32
    %c0_i32_0 = arith.constant 0 : i32
    %c0_i32_1 = arith.constant 0 : i32
    return %arg0, %c0_i32, %c0_i32_0 : i32, i32, i32
  }
}

module attributes {stable_mosaic.version = 11 : i64} {
  func.func @_residual_bn_relu_kernel(%arg0: i32, %arg1: memref<1x8x256xf32, #tpu.memory_space<vmem>>, %arg2: memref<1x8x256xf32, #tpu.memory_space<vmem>>, %arg3: memref<8x1xf32, #tpu.memory_space<vmem>>, %arg4: memref<8x1xf32, #tpu.memory_space<vmem>>, %arg5: memref<1x8x256xf32, #tpu.memory_space<vmem>>) attributes {dimension_semantics = [#tpu.dimension_semantics<parallel>], iteration_bounds = array<i64: 2>, scalar_prefetch = 0 : i64, scratch_operands = 0 : i64, tpu.core_type = #tpu.core_type<tc>, window_params = [{transform_indices = @transform_0, window_bounds = array<i64: 1, 8, 256>}, {transform_indices = @transform_1, window_bounds = array<i64: 1, 8, 256>}, {pipeline_mode = #tpu.pipeline_mode<synchronous>, transform_indices = @transform_2, window_bounds = array<i64: 8, 1>}, {pipeline_mode = #tpu.pipeline_mode<synchronous>, transform_indices = @transform_3, window_bounds = array<i64: 8, 1>}, {transform_indices = @transform_4, window_bounds = array<i64: 1, 8, 256>}]} {
    %c0 = arith.constant 0 : index
    %c0_0 = arith.constant 0 : index
    %c0_1 = arith.constant 0 : index
    %0 = vector.load %arg1[%c0, %c0_0, %c0_1] : memref<1x8x256xf32, #tpu.memory_space<vmem>>, vector<1x8x256xf32>
    %1 = vector.shape_cast %0 : vector<1x8x256xf32> to vector<8x256xf32>
    %c0_2 = arith.constant 0 : index
    %c0_3 = arith.constant 0 : index
    %c0_4 = arith.constant 0 : index
    %2 = vector.load %arg2[%c0_2, %c0_3, %c0_4] : memref<1x8x256xf32, #tpu.memory_space<vmem>>, vector<1x8x256xf32>
    %3 = vector.shape_cast %2 : vector<1x8x256xf32> to vector<8x256xf32>
    %c0_5 = arith.constant 0 : index
    %c0_6 = arith.constant 0 : index
    %4 = vector.load %arg3[%c0_5, %c0_6] : memref<8x1xf32, #tpu.memory_space<vmem>>, vector<8x1xf32>
    %5 = vector.broadcast %4 : vector<8x1xf32> to vector<8x256xf32>
    %6 = arith.mulf %3, %5 : vector<8x256xf32>
    %c0_7 = arith.constant 0 : index
    %c0_8 = arith.constant 0 : index
    %7 = vector.load %arg4[%c0_7, %c0_8] : memref<8x1xf32, #tpu.memory_space<vmem>>, vector<8x1xf32>
    %8 = vector.broadcast %7 : vector<8x1xf32> to vector<8x256xf32>
    %9 = arith.addf %6, %8 : vector<8x256xf32>
    %cst = arith.constant 0.000000e+00 : f32
    %10 = vector.broadcast %cst : f32 to vector<8x256xf32>
    %11 = arith.maximumf %9, %10 : vector<8x256xf32>
    %12 = arith.addf %1, %11 : vector<8x256xf32>
    %c0_9 = arith.constant 0 : index
    %c0_10 = arith.constant 0 : index
    %c0_11 = arith.constant 0 : index
    %13 = vector.load %arg5[%c0_9, %c0_10, %c0_11] : memref<1x8x256xf32, #tpu.memory_space<vmem>>, vector<1x8x256xf32>
    %14 = vector.shape_cast %13 : vector<1x8x256xf32> to vector<8x256xf32>
    %15 = vector.shape_cast %12 : vector<8x256xf32> to vector<1x8x256xf32>
    tpu.vector_store %arg5[%c0_9, %c0_10, %c0_11], %15 {strides = array<i32>} : memref<1x8x256xf32, #tpu.memory_space<vmem>>, vector<1x8x256xf32>,
    return
  }
  func.func @transform_0(%arg0: i32) -> (i32, i32, i32) {
    %c0_i32 = arith.constant 0 : i32
    %c0_i32_0 = arith.constant 0 : i32
    %c0_i32_1 = arith.constant 0 : i32
    return %arg0, %c0_i32, %c0_i32_0 : i32, i32, i32
  }
  func.func @transform_1(%arg0: i32) -> (i32, i32, i32) {
    %c0_i32 = arith.constant 0 : i32
    %c0_i32_0 = arith.constant 0 : i32
    %c0_i32_1 = arith.constant 0 : i32
    return %arg0, %c0_i32, %c0_i32_0 : i32, i32, i32
  }
  func.func @transform_2(%arg0: i32) -> (i32, i32) {
    %c0_i32 = arith.constant 0 : i32
    %c0_i32_0 = arith.constant 0 : i32
    %c0_i32_1 = arith.constant 0 : i32
    return %c0_i32, %c0_i32_0 : i32, i32
  }
  func.func @transform_3(%arg0: i32) -> (i32, i32) {
    %c0_i32 = arith.constant 0 : i32
    %c0_i32_0 = arith.constant 0 : i32
    %c0_i32_1 = arith.constant 0 : i32
    return %c0_i32, %c0_i32_0 : i32, i32
  }
  func.func @transform_4(%arg0: i32) -> (i32, i32, i32) {
    %c0_i32 = arith.constant 0 : i32
    %c0_i32_0 = arith.constant 0 : i32
    %c0_i32_1 = arith.constant 0 : i32
    return %arg0, %c0_i32, %c0_i32_0 : i32, i32, i32
  }
}

</mosaic_0001>

<llo_original>
// kernel: rrcnn_block_forward.6
$region0: #{rrcnn_block_forward.6}
  #allocation0 [shape = 'u32[]', space=smem, size = 0x4, offset = 0x4, fixed_abs, tag = 'smem constant byte address 0x4 - core index']
  #allocation1 [shape = 'u32[144,128]{1,0:T(1,128)}', space=vmem, size = 0x12000, scoped, tag = 'internal scratch']
  %s0 = inlined_call_operand.vmem [shape: f32[2,4,256], index: 0, kind: input, shape index: {}]
  %s1 = inlined_call_operand.vmem [shape: f32[8,4], index: 1, kind: input, shape index: {}]
  %s2 = inlined_call_operand.vmem [shape: f32[8,1], index: 2, kind: input, shape index: {}]
  %s3 = inlined_call_operand.vmem [shape: f32[2,8,256], index: 3, kind: output, shape index: {}]
  %s4 = sld [smem:[#allocation0]]
  $region45: #{rrcnn_block_forward.6} parent=0
    _
  %s6 = ssub.s32 1, %s4
  %s7 = scalar_select 0, %s6, %s4
  loop: start=0, step=1, limit=4
  $region2: #{rrcnn_block_forward.6} parent=0 // loop_pre_header
    _
  $region3: #{rrcnn_block_forward.6} parent=0 // loop_header
    %s9 = sphi 0, %s13
    %p10 = scmp.ge.s32.totalorder %s9, 4
    %s19 = sphi 0, %s21
    %s22 = sphi 0, %s19
    %s23 = sphi 0, %s22
    %s39 = sphi 0, %s23
    %s43 = sphi 0, %s43
    %s45 = sphi 0, %s43
    %s46 = sphi 0, %s45
    %s60 = sphi 0, %s46
    %s64 = sphi 0, %s64
    %s66 = sphi 0, %s64
    %s67 = sphi 0, %s66
    %s81 = sphi 0, %s67
    %s87 = sphi 0, %s89
    %s90 = sphi 0, %s87
    %s91 = sphi 0, %s90
    %s107 = sphi 0, %s91
  $region4: #{rrcnn_block_forward.6} parent=0 // loop_header_branch
    %12 = sbr.rel (%p10) target = $region8
  $region5: #{rrcnn_block_forward.6} parent=0 // loop_body
    %s14 = ssub.s32 %s9, 1
    %s15 = ssub.s32 %s9, 2
    %s16 = sadd.s32 %s9, 1
    %s17 = ssub.s32 %s9, %s16
    %p18 = scmp.eq.s32.totalorder %s17, 0
    %s20 = sadd.s32 %s19, 1
    %s21 = scalar_select %p18, %s19, %s20
    %p24 = pneg %p18
    %p25 = scmp.eq.s32.totalorder %s9, 1
    %p26 = por %p24, %p25
    %p27 = scmp.ne.s32.totalorder %s19, %s22
    %p28 = scmp.eq.s32.totalorder %s9, 0
    %p29 = por %p27, %p28
    %p30 = scmp.ne.s32.totalorder %s19, %s22
    %p31 = scmp.eq.s32.totalorder %s14, 1
    %p32 = por %p30, %p31
    %p33 = scmp.ne.s32.totalorder %s22, %s23
    %p34 = scmp.eq.s32.totalorder %s14, 0
    %p35 = por %p33, %p34
    %p36 = scmp.ne.s32.totalorder %s22, %s23
    %p37 = scmp.eq.s32.totalorder %s15, 1
    %p38 = por %p36, %p37
    %p40 = scmp.ne.s32.totalorder %s23, %s39
    %p41 = scmp.eq.s32.totalorder %s15, 0
    %p42 = por %p40, %p41
    %s44 = sadd.s32 %s43, 1
    %p47 = scmp.eq.s32.totalorder %s9, 1
    %p48 = scmp.ne.s32.totalorder %s43, %s45
    %p49 = scmp.eq.s32.totalorder %s9, 0
    %p50 = por %p48, %p49
    %p51 = scmp.ne.s32.totalorder %s43, %s45
    %p52 = scmp.eq.s32.totalorder %s14, 1
    %p53 = por %p51, %p52
    %p54 = scmp.ne.s32.totalorder %s45, %s46
    %p55 = scmp.eq.s32.totalorder %s14, 0
    %p56 = por %p54, %p55
    %p57 = scmp.ne.s32.totalorder %s45, %s46
    %p58 = scmp.eq.s32.totalorder %s15, 1
    %p59 = por %p57, %p58
    %p61 = scmp.ne.s32.totalorder %s46, %s60
    %p62 = scmp.eq.s32.totalorder %s15, 0
    %p63 = por %p61, %p62
    %s65 = sadd.s32 %s64, 1
    %p68 = scmp.eq.s32.totalorder %s9, 1
    %p69 = scmp.ne.s32.totalorder %s64, %s66
    %p70 = scmp.eq.s32.totalorder %s9, 0
    %p71 = por %p69, %p70
    %p72 = scmp.ne.s32.totalorder %s64, %s66
    %p73 = scmp.eq.s32.totalorder %s14, 1
    %p74 = por %p72, %p73
    %p75 = scmp.ne.s32.totalorder %s66, %s67
    %p76 = scmp.eq.s32.totalorder %s14, 0
    %p77 = por %p75, %p76
    %p78 = scmp.ne.s32.totalorder %s66, %s67
    %p79 = scmp.eq.s32.totalorder %s15, 1
    %p80 = por %p78, %p79
    %p82 = scmp.ne.s32.totalorder %s67, %s81
    %p83 = scmp.eq.s32.totalorder %s15, 0
    %p84 = por %p82, %p83
    %s85 = ssub.s32 %s9, %s16
    %p86 = scmp.eq.s32.totalorder %s85, 0
    %s88 = sadd.s32 %s87, 1
    %s89 = scalar_select %p86, %s87, %s88
    %p92 = pneg %p86
    %p93 = scmp.eq.s32.totalorder %s9, 1
    %p94 = por %p92, %p93
    %p95 = scmp.ne.s32.totalorder %s87, %s90
    %p96 = scmp.eq.s32.totalorder %s9, 0
    %p97 = por %p95, %p96
    %p98 = scmp.ne.s32.totalorder %s87, %s90
    %p99 = scmp.eq.s32.totalorder %s14, 1
    %p100 = por %p98, %p99
    %p101 = scmp.ne.s32.totalorder %s90, %s91
    %p102 = scmp.eq.s32.totalorder %s14, 0
    %p103 = por %p101, %p102
    %p104 = scmp.ne.s32.totalorder %s90, %s91
    %p105 = scmp.eq.s32.totalorder %s15, 1
    %p106 = por %p104, %p105
    %p108 = scmp.ne.s32.totalorder %s91, %s107
    %p109 = scmp.eq.s32.totalorder %s15, 0
    %p110 = por %p108, %p109
    %p111 = scmp.le.s32.totalorder 1, %s9
    %p112 = scmp.lt.s32.totalorder %s9, 3
    %p113 = pnand %p111, %p112
    %p114 = pneg %p113
    // Predicated region
    $region9: #{rrcnn_block_forward.6} parent=5 // pred_check
      _
    $region10: #{rrcnn_block_forward.6} parent=5 // pred_check_branch
      %116 = sbr.rel (%p113) target = $region12
    $region11: #{rrcnn_block_forward.6} parent=5 // pred_region
      %s117 = ssub.s32 %s9, 1
      // Predicated region
      $region13: #{rrcnn_block_forward.6} parent=11 // pred_check
        %p118 = pneg %p56
      $region14: #{rrcnn_block_forward.6} parent=11 // pred_check_branch
        %120 = sbr.rel (%p118) target = $region16
      $region15: #{rrcnn_block_forward.6} parent=11 // pred_region
        _
      $region16: #{rrcnn_block_forward.6} parent=11 // pred_fallthru
        _
      // Predicated region
      $region17: #{rrcnn_block_forward.6} parent=11 // pred_check
        %p121 = pneg %p77
      $region18: #{rrcnn_block_forward.6} parent=11 // pred_check_branch
        %123 = sbr.rel (%p121) target = $region20
      $region19: #{rrcnn_block_forward.6} parent=11 // pred_region
        _
      $region20: #{rrcnn_block_forward.6} parent=11 // pred_fallthru
        _
    $region12: #{rrcnn_block_forward.6} parent=5 // pred_fallthru
      _
    %p124 = scmp.lt.s32.totalorder %s9, 2
    // Predicated region
    $region21: #{rrcnn_block_forward.6} parent=5 // pred_check
      %p125 = pneg %p124
    $region22: #{rrcnn_block_forward.6} parent=5 // pred_check_branch
      %127 = sbr.rel (%p125) target = $region24
    $region23: #{rrcnn_block_forward.6} parent=5 // pred_region
      // Predicated region
      $region25: #{rrcnn_block_forward.6} parent=23 // pred_check
        %p128 = pneg %p29
      $region26: #{rrcnn_block_forward.6} parent=23 // pred_check_branch
        %130 = sbr.rel (%p128) target = $region28
      $region27: #{rrcnn_block_forward.6} parent=23 // pred_region
        %p131 = scmp.lt.s32.totalorder %s9, 1
        %s132 = scalar_select %p131, %s9, 1
        %s133 = smul.addr %s132, 2
        %s134 = smul.addr %s133, 4
        %s135 = scalar_lea.vmem %s0, %s134
      $region28: #{rrcnn_block_forward.6} parent=23 // pred_fallthru
        _
    $region24: #{rrcnn_block_forward.6} parent=5 // pred_fallthru
      _
    %p136 = scmp.le.s32.totalorder 1, %s9
    %p137 = scmp.lt.s32.totalorder %s9, 3
    %p138 = pnand %p136, %p137
    %p139 = pneg %p138
    // Predicated region
    $region29: #{rrcnn_block_forward.6} parent=5 // pred_check
      _
    $region30: #{rrcnn_block_forward.6} parent=5 // pred_check_branch
      %141 = sbr.rel (%p138) target = $region32
    $region31: #{rrcnn_block_forward.6} parent=5 // pred_region
      %s142 = ssub.s32 %s9, 1
      %p143 = scmp.lt.s32.totalorder %s14, 1
      %s144 = scalar_select %p143, %s14, 1
      %s145 = smul.addr %s144, 2
      %s146 = smul.addr %s145, 4
      %s147 = scalar_lea.vmem %s0, %s146
      %p148 = pneg %p35
      %p149 = pneg %p32
      %p150 = pneg %p56
      %p151 = pneg %p53
      %p152 = pneg %p77
      %p153 = pneg %p74
      %p154 = pneg %p103
      %p155 = pneg %p100
      %p156 = scmp.lt.s32.totalorder %s14, 1
      %s157 = scalar_select %p156, %s14, 1
      %s158 = smul.addr %s157, 2
      %s159 = smul.addr %s158, 8
      %s160 = scalar_lea.vmem %s3, %s159
      %p161 = scmp.lt.s32.totalorder %s14, 1
      %s162 = scalar_select %p161, %s14, 1
      %s163 = smul.addr %s162, 2
      %s164 = smul.addr %s163, 4
      %s165 = scalar_lea.vmem %s0, %s164
      %p166 = scmp.lt.s32.totalorder %s14, 1
      %s167 = scalar_select %p166, %s14, 1
      %s168 = smul.addr %s167, 2
      %s169 = smul.addr %s168, 8
      %s170 = scalar_lea.vmem %s3, %s169
      %v171 = vld [vmem:[%s1] sm:$0xff]
      %v172 = vld [vmem:[%s165] sm:$0xff]
      %v173 = vld [vmem:[%s2] sm:$0xff]
      %175 = vset.pattern.permute.xlu0 0
      %176 = vperm.xlu0 %175, %v173
      %v177 = vpop.permute.xlu0 %176
      %v180 = vcombine.high %v172, %v172
      %vm181 = vcmask 31744
      %v183 = vsel %vm181, %v171, 0
      %vm185 = vcmask 1043456
      %v186 = vsel %vm185, %v172, 0
      %v188 = vsel %vm185, %v180, 0
      %190 = vmatprep.subr.mxu0 %v188
      %191 = vmatpush1.msra.mxu0 %v186
      %192 = vmatprep.subr.mxu0 0.0
      %193 = vmatpush1.msra.mxu0 0.0
      %194 = vmatprep.subr.mxu0 0.0
      %195 = vmatpush1.msra.mxu0 0.0
      %196 = vmatprep.subr.mxu0 0.0
      %197 = vmatpush1.msra.mxu0 0.0
      %198 = vmatprep.subr.mxu0 0.0
      %199 = vmatpush1.msra.mxu0 0.0
      %200 = vmatprep.subr.mxu0 0.0
      %201 = vmatpush1.msra.mxu0 0.0
      %202 = vmatprep.subr.mxu0 0.0
      %203 = vmatpush1.msra.mxu0 0.0
      %204 = vmatprep.subr.mxu0 0.0
      %205 = vmatpush1.msra.mxu0 0.0
      %206 = vmatprep.subr.mxu0 0.0
      %207 = vmatpush1.msra.mxu0 0.0
      %208 = vmatprep.subr.mxu0 0.0
      %209 = vmatpush1.msra.mxu0 0.0
      %210 = vmatprep.subr.mxu0 0.0
      %211 = vmatpush1.msra.mxu0 0.0
      %212 = vmatprep.subr.mxu0 0.0
      %213 = vmatpush1.msra.mxu0 0.0
      %214 = vmatprep.subr.mxu0 0.0
      %215 = vmatpush1.msra.mxu0 0.0
      %216 = vmatprep.subr.mxu0 0.0
      %217 = vmatpush1.msra.mxu0 0.0
      %218 = vmatprep.subr.mxu0 0.0
      %219 = vmatpush1.msra.mxu0 0.0
      %220 = vmatprep.subr.mxu0 0.0
      %221 = vmatpush1.msra.mxu0 0.0
      %222 = vmatprep.subr.mxu0 0.0
      %223 = vmatpush1.msra.mxu0 0.0
      %224 = vmatprep.subr.mxu0 0.0
      %225 = vmatpush1.msra.mxu0 0.0
      %226 = vmatprep.subr.mxu0 0.0
      %227 = vmatpush1.msra.mxu0 0.0
      %228 = vmatprep.subr.mxu0 0.0
      %229 = vmatpush1.msra.mxu0 0.0
      %230 = vmatprep.subr.mxu0 0.0
      %231 = vmatpush1.msra.mxu0 0.0
      %232 = vmatprep.subr.mxu0 0.0
      %233 = vmatpush1.msra.mxu0 0.0
      %234 = vmatprep.subr.mxu0 0.0
      %235 = vmatpush1.msra.mxu0 0.0
      %236 = vmatprep.subr.mxu0 0.0
      %237 = vmatpush1.msra.mxu0 0.0
      %238 = vmatprep.subr.mxu0 0.0
      %239 = vmatpush1.msra.mxu0 0.0
      %240 = vmatprep.subr.mxu0 0.0
      %241 = vmatpush1.msra.mxu0 0.0
      %242 = vmatprep.subr.mxu0 0.0
      %243 = vmatpush1.msra.mxu0 0.0
      %244 = vmatprep.subr.mxu0 0.0
      %245 = vmatpush1.msra.mxu0 0.0
      %246 = vmatprep.subr.mxu0 0.0
      %247 = vmatpush1.msra.mxu0 0.0
      %248 = vmatprep.subr.mxu0 0.0
      %249 = vmatpush1.msra.mxu0 0.0
      %250 = vmatprep.subr.mxu0 0.0
      %251 = vmatpush1.msra.mxu0 0.0
      %252 = vmatprep.subr.mxu0 0.0
      %253 = vmatpush1.msra.mxu0 0.0
      %254 = vmatprep.mubr.f32.mxu0 0.0
      %255 = vmatmul.mubr.f32.gmra.mrb[0].mxu0 %v183
      %v256 = vpop.f32.mrb[0].mxu0
      %v257 = vadd.f32 %v177, %v256
      %v258 = vpop.f32.mrb[0].mxu0
      %v259 = vadd.f32 %v177, %v258
      %260 = vdwg.mxu0
      %261 = vst [vmem:[%s170] sm:$0xff] %v257
      %262 = vst [vmem:[%s170 + $0x8] sm:$0xff] %v259
      %p263 = scmp.lt.s32.totalorder %s14, 1
      %s264 = scalar_select %p263, %s14, 1
      %s265 = smul.addr %s264, 2
      %s266 = smul.addr %s265, 8
      %s267 = scalar_lea.vmem %s3, %s266
      // Predicated region
      $region33: #{rrcnn_block_forward.6} parent=31 // pred_check
        %p268 = pneg %p100
      $region34: #{rrcnn_block_forward.6} parent=31 // pred_check_branch
        %270 = sbr.rel (%p268) target = $region36
      $region35: #{rrcnn_block_forward.6} parent=31 // pred_region
        _
      $region36: #{rrcnn_block_forward.6} parent=31 // pred_fallthru
        _
    $region32: #{rrcnn_block_forward.6} parent=5 // pred_fallthru
      _
    %p271 = scmp.le.s32.totalorder 2, %s9
    // Predicated region
    $region37: #{rrcnn_block_forward.6} parent=5 // pred_check
      %p272 = pneg %p271
    $region38: #{rrcnn_block_forward.6} parent=5 // pred_check_branch
      %274 = sbr.rel (%p272) target = $region40
    $region39: #{rrcnn_block_forward.6} parent=5 // pred_region
      %s275 = ssub.s32 %s9, 2
      // Predicated region
      $region41: #{rrcnn_block_forward.6} parent=39 // pred_check
        %p276 = pneg %p106
      $region42: #{rrcnn_block_forward.6} parent=39 // pred_check_branch
        %278 = sbr.rel (%p276) target = $region44
      $region43: #{rrcnn_block_forward.6} parent=39 // pred_region
        %p279 = scmp.lt.s32.totalorder %s15, 1
        %s280 = scalar_select %p279, %s15, 1
        %s281 = smul.addr %s280, 2
        %s282 = smul.addr %s281, 8
        %s283 = scalar_lea.vmem %s3, %s282
      $region44: #{rrcnn_block_forward.6} parent=39 // pred_fallthru
        _
    $region40: #{rrcnn_block_forward.6} parent=5 // pred_fallthru
      _
  $region6: #{rrcnn_block_forward.6} parent=0 // loop_footer
    %s13 = sadd.s32 1, %s9
  $region7: #{rrcnn_block_forward.6} parent=0 // loop_footer_branch
    %8 = sbr.rel target = $region3
  $region8: #{rrcnn_block_forward.6} parent=0 // loop_exit
    _

// kernel: rrcnn_block_forward.11
$region0: #{rrcnn_block_forward.11}
  #allocation0 [shape = 'u32[]', space=smem, size = 0x4, offset = 0x4, fixed_abs, tag = 'smem constant byte address 0x4 - core index']
  #allocation1 [shape = 'u32[144,128]{1,0:T(1,128)}', space=vmem, size = 0x12000, scoped, tag = 'internal scratch']
  %s0 = inlined_call_operand.vmem [shape: f32[2,8,256], index: 0, kind: input, shape index: {}]
  %s1 = inlined_call_operand.vmem [shape: f32[2,8,256], index: 1, kind: input, shape index: {}]
  %s2 = inlined_call_operand.vmem [shape: f32[8,1], index: 2, kind: input, shape index: {}]
  %s3 = inlined_call_operand.vmem [shape: f32[8,1], index: 3, kind: input, shape index: {}]
  %s4 = inlined_call_operand.vmem [shape: f32[2,8,256], index: 4, kind: output, shape index: {}]
  %s5 = sld [smem:[#allocation0]]
  $region49: #{rrcnn_block_forward.11} parent=0
    _
  %s7 = ssub.s32 1, %s5
  %s8 = scalar_select 0, %s7, %s5
  loop: start=0, step=1, limit=4
  $region2: #{rrcnn_block_forward.11} parent=0 // loop_pre_header
    _
  $region3: #{rrcnn_block_forward.11} parent=0 // loop_header
    %s10 = sphi 0, %s14
    %p11 = scmp.ge.s32.totalorder %s10, 4
    %s20 = sphi 0, %s22
    %s23 = sphi 0, %s20
    %s24 = sphi 0, %s23
    %s40 = sphi 0, %s24
    %s46 = sphi 0, %s48
    %s49 = sphi 0, %s46
    %s50 = sphi 0, %s49
    %s66 = sphi 0, %s50
    %s70 = sphi 0, %s70
    %s72 = sphi 0, %s70
    %s73 = sphi 0, %s72
    %s87 = sphi 0, %s73
    %s91 = sphi 0, %s91
    %s93 = sphi 0, %s91
    %s94 = sphi 0, %s93
    %s108 = sphi 0, %s94
    %s114 = sphi 0, %s116
    %s117 = sphi 0, %s114
    %s118 = sphi 0, %s117
    %s134 = sphi 0, %s118
  $region4: #{rrcnn_block_forward.11} parent=0 // loop_header_branch
    %13 = sbr.rel (%p11) target = $region8
  $region5: #{rrcnn_block_forward.11} parent=0 // loop_body
    %s15 = ssub.s32 %s10, 1
    %s16 = ssub.s32 %s10, 2
    %s17 = sadd.s32 %s10, 1
    %s18 = ssub.s32 %s10, %s17
    %p19 = scmp.eq.s32.totalorder %s18, 0
    %s21 = sadd.s32 %s20, 1
    %s22 = scalar_select %p19, %s20, %s21
    %p25 = pneg %p19
    %p26 = scmp.eq.s32.totalorder %s10, 1
    %p27 = por %p25, %p26
    %p28 = scmp.ne.s32.totalorder %s20, %s23
    %p29 = scmp.eq.s32.totalorder %s10, 0
    %p30 = por %p28, %p29
    %p31 = scmp.ne.s32.totalorder %s20, %s23
    %p32 = scmp.eq.s32.totalorder %s15, 1
    %p33 = por %p31, %p32
    %p34 = scmp.ne.s32.totalorder %s23, %s24
    %p35 = scmp.eq.s32.totalorder %s15, 0
    %p36 = por %p34, %p35
    %p37 = scmp.ne.s32.totalorder %s23, %s24
    %p38 = scmp.eq.s32.totalorder %s16, 1
    %p39 = por %p37, %p38
    %p41 = scmp.ne.s32.totalorder %s24, %s40
    %p42 = scmp.eq.s32.totalorder %s16, 0
    %p43 = por %p41, %p42
    %s44 = ssub.s32 %s10, %s17
    %p45 = scmp.eq.s32.totalorder %s44, 0
    %s47 = sadd.s32 %s46, 1
    %s48 = scalar_select %p45, %s46, %s47
    %p51 = pneg %p45
    %p52 = scmp.eq.s32.totalorder %s10, 1
    %p53 = por %p51, %p52
    %p54 = scmp.ne.s32.totalorder %s46, %s49
    %p55 = scmp.eq.s32.totalorder %s10, 0
    %p56 = por %p54, %p55
    %p57 = scmp.ne.s32.totalorder %s46, %s49
    %p58 = scmp.eq.s32.totalorder %s15, 1
    %p59 = por %p57, %p58
    %p60 = scmp.ne.s32.totalorder %s49, %s50
    %p61 = scmp.eq.s32.totalorder %s15, 0
    %p62 = por %p60, %p61
    %p63 = scmp.ne.s32.totalorder %s49, %s50
    %p64 = scmp.eq.s32.totalorder %s16, 1
    %p65 = por %p63, %p64
    %p67 = scmp.ne.s32.totalorder %s50, %s66
    %p68 = scmp.eq.s32.totalorder %s16, 0
    %p69 = por %p67, %p68
    %s71 = sadd.s32 %s70, 1
    %p74 = scmp.eq.s32.totalorder %s10, 1
    %p75 = scmp.ne.s32.totalorder %s70, %s72
    %p76 = scmp.eq.s32.totalorder %s10, 0
    %p77 = por %p75, %p76
    %p78 = scmp.ne.s32.totalorder %s70, %s72
    %p79 = scmp.eq.s32.totalorder %s15, 1
    %p80 = por %p78, %p79
    %p81 = scmp.ne.s32.totalorder %s72, %s73
    %p82 = scmp.eq.s32.totalorder %s15, 0
    %p83 = por %p81, %p82
    %p84 = scmp.ne.s32.totalorder %s72, %s73
    %p85 = scmp.eq.s32.totalorder %s16, 1
    %p86 = por %p84, %p85
    %p88 = scmp.ne.s32.totalorder %s73, %s87
    %p89 = scmp.eq.s32.totalorder %s16, 0
    %p90 = por %p88, %p89
    %s92 = sadd.s32 %s91, 1
    %p95 = scmp.eq.s32.totalorder %s10, 1
    %p96 = scmp.ne.s32.totalorder %s91, %s93
    %p97 = scmp.eq.s32.totalorder %s10, 0
    %p98 = por %p96, %p97
    %p99 = scmp.ne.s32.totalorder %s91, %s93
    %p100 = scmp.eq.s32.totalorder %s15, 1
    %p101 = por %p99, %p100
    %p102 = scmp.ne.s32.totalorder %s93, %s94
    %p103 = scmp.eq.s32.totalorder %s15, 0
    %p104 = por %p102, %p103
    %p105 = scmp.ne.s32.totalorder %s93, %s94
    %p106 = scmp.eq.s32.totalorder %s16, 1
    %p107 = por %p105, %p106
    %p109 = scmp.ne.s32.totalorder %s94, %s108
    %p110 = scmp.eq.s32.totalorder %s16, 0
    %p111 = por %p109, %p110
    %s112 = ssub.s32 %s10, %s17
    %p113 = scmp.eq.s32.totalorder %s112, 0
    %s115 = sadd.s32 %s114, 1
    %s116 = scalar_select %p113, %s114, %s115
    %p119 = pneg %p113
    %p120 = scmp.eq.s32.totalorder %s10, 1
    %p121 = por %p119, %p120
    %p122 = scmp.ne.s32.totalorder %s114, %s117
    %p123 = scmp.eq.s32.totalorder %s10, 0
    %p124 = por %p122, %p123
    %p125 = scmp.ne.s32.totalorder %s114, %s117
    %p126 = scmp.eq.s32.totalorder %s15, 1
    %p127 = por %p125, %p126
    %p128 = scmp.ne.s32.totalorder %s117, %s118
    %p129 = scmp.eq.s32.totalorder %s15, 0
    %p130 = por %p128, %p129
    %p131 = scmp.ne.s32.totalorder %s117, %s118
    %p132 = scmp.eq.s32.totalorder %s16, 1
    %p133 = por %p131, %p132
    %p135 = scmp.ne.s32.totalorder %s118, %s134
    %p136 = scmp.eq.s32.totalorder %s16, 0
    %p137 = por %p135, %p136
    %p138 = scmp.le.s32.totalorder 1, %s10
    %p139 = scmp.lt.s32.totalorder %s10, 3
    %p140 = pnand %p138, %p139
    %p141 = pneg %p140
    // Predicated region
    $region9: #{rrcnn_block_forward.11} parent=5 // pred_check
      _
    $region10: #{rrcnn_block_forward.11} parent=5 // pred_check_branch
      %143 = sbr.rel (%p140) target = $region12
    $region11: #{rrcnn_block_forward.11} parent=5 // pred_region
      %s144 = ssub.s32 %s10, 1
      // Predicated region
      $region13: #{rrcnn_block_forward.11} parent=11 // pred_check
        %p145 = pneg %p83
      $region14: #{rrcnn_block_forward.11} parent=11 // pred_check_branch
        %147 = sbr.rel (%p145) target = $region16
      $region15: #{rrcnn_block_forward.11} parent=11 // pred_region
        _
      $region16: #{rrcnn_block_forward.11} parent=11 // pred_fallthru
        _
      // Predicated region
      $region17: #{rrcnn_block_forward.11} parent=11 // pred_check
        %p148 = pneg %p104
      $region18: #{rrcnn_block_forward.11} parent=11 // pred_check_branch
        %150 = sbr.rel (%p148) target = $region20
      $region19: #{rrcnn_block_forward.11} parent=11 // pred_region
        _
      $region20: #{rrcnn_block_forward.11} parent=11 // pred_fallthru
        _
    $region12: #{rrcnn_block_forward.11} parent=5 // pred_fallthru
      _
    %p151 = scmp.lt.s32.totalorder %s10, 2
    // Predicated region
    $region21: #{rrcnn_block_forward.11} parent=5 // pred_check
      %p152 = pneg %p151
    $region22: #{rrcnn_block_forward.11} parent=5 // pred_check_branch
      %154 = sbr.rel (%p152) target = $region24
    $region23: #{rrcnn_block_forward.11} parent=5 // pred_region
      // Predicated region
      $region25: #{rrcnn_block_forward.11} parent=23 // pred_check
        %p155 = pneg %p30
      $region26: #{rrcnn_block_forward.11} parent=23 // pred_check_branch
        %157 = sbr.rel (%p155) target = $region28
      $region27: #{rrcnn_block_forward.11} parent=23 // pred_region
        %p158 = scmp.lt.s32.totalorder %s10, 1
        %s159 = scalar_select %p158, %s10, 1
        %s160 = smul.addr %s159, 2
        %s161 = smul.addr %s160, 8
        %s162 = scalar_lea.vmem %s0, %s161
      $region28: #{rrcnn_block_forward.11} parent=23 // pred_fallthru
        _
      // Predicated region
      $region29: #{rrcnn_block_forward.11} parent=23 // pred_check
        %p163 = pneg %p56
      $region30: #{rrcnn_block_forward.11} parent=23 // pred_check_branch
        %165 = sbr.rel (%p163) target = $region32
      $region31: #{rrcnn_block_forward.11} parent=23 // pred_region
        %p166 = scmp.lt.s32.totalorder %s10, 1
        %s167 = scalar_select %p166, %s10, 1
        %s168 = smul.addr %s167, 2
        %s169 = smul.addr %s168, 8
        %s170 = scalar_lea.vmem %s1, %s169
      $region32: #{rrcnn_block_forward.11} parent=23 // pred_fallthru
        _
    $region24: #{rrcnn_block_forward.11} parent=5 // pred_fallthru
      _
    %p171 = scmp.le.s32.totalorder 1, %s10
    %p172 = scmp.lt.s32.totalorder %s10, 3
    %p173 = pnand %p171, %p172
    %p174 = pneg %p173
    // Predicated region
    $region33: #{rrcnn_block_forward.11} parent=5 // pred_check
      _
    $region34: #{rrcnn_block_forward.11} parent=5 // pred_check_branch
      %176 = sbr.rel (%p173) target = $region36
    $region35: #{rrcnn_block_forward.11} parent=5 // pred_region
      %s177 = ssub.s32 %s10, 1
      %p178 = scmp.lt.s32.totalorder %s15, 1
      %s179 = scalar_select %p178, %s15, 1
      %s180 = smul.addr %s179, 2
      %s181 = smul.addr %s180, 8
      %s182 = scalar_lea.vmem %s0, %s181
      %p183 = pneg %p36
      %p184 = pneg %p33
      %p185 = scmp.lt.s32.totalorder %s15, 1
      %s186 = scalar_select %p185, %s15, 1
      %s187 = smul.addr %s186, 2
      %s188 = smul.addr %s187, 8
      %s189 = scalar_lea.vmem %s1, %s188
      %p190 = pneg %p62
      %p191 = pneg %p59
      %p192 = pneg %p83
      %p193 = pneg %p80
      %p194 = pneg %p104
      %p195 = pneg %p101
      %p196 = pneg %p130
      %p197 = pneg %p127
      %p198 = scmp.lt.s32.totalorder %s15, 1
      %s199 = scalar_select %p198, %s15, 1
      %s200 = smul.addr %s199, 2
      %s201 = smul.addr %s200, 8
      %s202 = scalar_lea.vmem %s4, %s201
      %p203 = scmp.lt.s32.totalorder %s15, 1
      %s204 = scalar_select %p203, %s15, 1
      %s205 = smul.addr %s204, 2
      %s206 = smul.addr %s205, 8
      %s207 = scalar_lea.vmem %s0, %s206
      %p208 = scmp.lt.s32.totalorder %s15, 1
      %s209 = scalar_select %p208, %s15, 1
      %s210 = smul.addr %s209, 2
      %s211 = smul.addr %s210, 8
      %s212 = scalar_lea.vmem %s1, %s211
      %p213 = scmp.lt.s32.totalorder %s15, 1
      %s214 = scalar_select %p213, %s15, 1
      %s215 = smul.addr %s214, 2
      %s216 = smul.addr %s215, 8
      %s217 = scalar_lea.vmem %s4, %s216
      %v218 = vld [vmem:[%s207] sm:$0xff]
      %v219 = vld [vmem:[%s207 + $0x8] sm:$0xff]
      %v220 = vld [vmem:[%s212] sm:$0xff]
      %v221 = vld [vmem:[%s212 + $0x8] sm:$0xff]
      %v222 = vld [vmem:[%s2] sm:$0xff]
      %224 = vset.pattern.permute.xlu0 0
      %225 = vperm.xlu0 %224, %v222
      %v226 = vpop.permute.xlu0 %225
      %v228 = vmul.f32 %v220, %v226
      %v229 = vmul.f32 %v221, %v226
      %v230 = vld [vmem:[%s3] sm:$0xff]
      %232 = vset.pattern.permute.xlu0 0
      %233 = vperm.xlu0 %232, %v230
      %v234 = vpop.permute.xlu0 %233
      %v236 = vadd.f32 %v228, %v234
      %v237 = vadd.f32 %v229, %v234
      %v238 = vmax.f32 %v236, 0.0
      %v239 = vmax.f32 %v237, 0.0
      %v240 = vadd.f32 %v218, %v238
      %v241 = vadd.f32 %v219, %v239
      %242 = vst [vmem:[%s217] sm:$0xff] %v240
      %243 = vst [vmem:[%s217 + $0x8] sm:$0xff] %v241
      %p244 = scmp.lt.s32.totalorder %s15, 1
      %s245 = scalar_select %p244, %s15, 1
      %s246 = smul.addr %s245, 2
      %s247 = smul.addr %s246, 8
      %s248 = scalar_lea.vmem %s4, %s247
      // Predicated region
      $region37: #{rrcnn_block_forward.11} parent=35 // pred_check
        %p249 = pneg %p127
      $region38: #{rrcnn_block_forward.11} parent=35 // pred_check_branch
        %251 = sbr.rel (%p249) target = $region40
      $region39: #{rrcnn_block_forward.11} parent=35 // pred_region
        _
      $region40: #{rrcnn_block_forward.11} parent=35 // pred_fallthru
        _
    $region36: #{rrcnn_block_forward.11} parent=5 // pred_fallthru
      _
    %p252 = scmp.le.s32.totalorder 2, %s10
    // Predicated region
    $region41: #{rrcnn_block_forward.11} parent=5 // pred_check
      %p253 = pneg %p252
    $region42: #{rrcnn_block_forward.11} parent=5 // pred_check_branch
      %255 = sbr.rel (%p253) target = $region44
    $region43: #{rrcnn_block_forward.11} parent=5 // pred_region
      %s256 = ssub.s32 %s10, 2
      // Predicated region
      $region45: #{rrcnn_block_forward.11} parent=43 // pred_check
        %p257 = pneg %p133
      $region46: #{rrcnn_block_forward.11} parent=43 // pred_check_branch
        %259 = sbr.rel (%p257) target = $region48
      $region47: #{rrcnn_block_forward.11} parent=43 // pred_region
        %p260 = scmp.lt.s32.totalorder %s16, 1
        %s261 = scalar_select %p260, %s16, 1
        %s262 = smul.addr %s261, 2
        %s263 = smul.addr %s262, 8
        %s264 = scalar_lea.vmem %s4, %s263
      $region48: #{rrcnn_block_forward.11} parent=43 // pred_fallthru
        _
    $region44: #{rrcnn_block_forward.11} parent=5 // pred_fallthru
      _
  $region6: #{rrcnn_block_forward.11} parent=0 // loop_footer
    %s14 = sadd.s32 1, %s10
  $region7: #{rrcnn_block_forward.11} parent=0 // loop_footer_branch
    %9 = sbr.rel target = $region3
  $region8: #{rrcnn_block_forward.11} parent=0 // loop_exit
    _

// kernel: rrcnn_block_forward.7
$region0: #{rrcnn_block_forward.7}
  #allocation0 [shape = 'u32[]', space=smem, size = 0x4, offset = 0x4, fixed_abs, tag = 'smem constant byte address 0x4 - core index']
  #allocation1 [shape = 'u32[144,128]{1,0:T(1,128)}', space=vmem, size = 0x12000, scoped, tag = 'internal scratch']
  #allocation2 [shape = 'f32[8,512]{1,0:T(8,128)}', space=vmem, size = 0x4000, scoped, tag = 'scratch operand']
  #allocation3 [shape = 'f32[72,256]{1,0:T(8,128)}', space=vmem, size = 0x12000, scoped, tag = 'scratch operand']
  %s0 = inlined_call_operand.vmem [shape: f32[2,8,256], index: 0, kind: input, shape index: {}]
  %s1 = inlined_call_operand.vmem [shape: f32[8,1], index: 1, kind: input, shape index: {}]
  %s2 = inlined_call_operand.vmem [shape: f32[8,1], index: 2, kind: input, shape index: {}]
  %s3 = inlined_call_operand.vmem [shape: bf16[8,72], index: 3, kind: input, shape index: {}]
  %s4 = inlined_call_operand.vmem [shape: f32[2,8,256], index: 4, kind: output, shape index: {0}]
  %s5 = inlined_call_operand.vmem [shape: f32[2,8,1], index: 5, kind: output, shape index: {1}]
  %s6 = inlined_call_operand.vmem [shape: f32[2,8,1], index: 6, kind: output, shape index: {2}]
  %7 = xla_tuple %s4, %s5, %s6
  %s8 = sld [smem:[#allocation0]]
  $region65: #{rrcnn_block_forward.7} parent=0
    _
  %s10 = ssub.s32 1, %s8
  %s11 = scalar_select 0, %s10, %s8
  loop: start=0, step=1, limit=4
  $region2: #{rrcnn_block_forward.7} parent=0 // loop_pre_header
    _
  $region3: #{rrcnn_block_forward.7} parent=0 // loop_header
    %s13 = sphi 0, %s17
    %p14 = scmp.ge.s32.totalorder %s13, 4
    %s23 = sphi 0, %s25
    %s26 = sphi 0, %s23
    %s27 = sphi 0, %s26
    %s43 = sphi 0, %s27
    %s47 = sphi 0, %s47
    %s49 = sphi 0, %s47
    %s50 = sphi 0, %s49
    %s64 = sphi 0, %s50
    %s68 = sphi 0, %s68
    %s70 = sphi 0, %s68
    %s71 = sphi 0, %s70
    %s85 = sphi 0, %s71
    %s89 = sphi 0, %s89
    %s91 = sphi 0, %s89
    %s92 = sphi 0, %s91
    %s106 = sphi 0, %s92
    %s112 = sphi 0, %s114
    %s115 = sphi 0, %s112
    %s116 = sphi 0, %s115
    %s132 = sphi 0, %s116
    %s138 = sphi 0, %s140
    %s141 = sphi 0, %s138
    %s142 = sphi 0, %s141
    %s158 = sphi 0, %s142
    %s164 = sphi 0, %s166
    %s167 = sphi 0, %s164
    %s168 = sphi 0, %s167
    %s184 = sphi 0, %s168
  $region4: #{rrcnn_block_forward.7} parent=0 // loop_header_branch
    %16 = sbr.rel (%p14) target = $region8
  $region5: #{rrcnn_block_forward.7} parent=0 // loop_body
    %s18 = ssub.s32 %s13, 1
    %s19 = ssub.s32 %s13, 2
    %s20 = sadd.s32 %s13, 1
    %s21 = ssub.s32 %s13, %s20
    %p22 = scmp.eq.s32.totalorder %s21, 0
    %s24 = sadd.s32 %s23, 1
    %s25 = scalar_select %p22, %s23, %s24
    %p28 = pneg %p22
    %p29 = scmp.eq.s32.totalorder %s13, 1
    %p30 = por %p28, %p29
    %p31 = scmp.ne.s32.totalorder %s23, %s26
    %p32 = scmp.eq.s32.totalorder %s13, 0
    %p33 = por %p31, %p32
    %p34 = scmp.ne.s32.totalorder %s23, %s26
    %p35 = scmp.eq.s32.totalorder %s18, 1
    %p36 = por %p34, %p35
    %p37 = scmp.ne.s32.totalorder %s26, %s27
    %p38 = scmp.eq.s32.totalorder %s18, 0
    %p39 = por %p37, %p38
    %p40 = scmp.ne.s32.totalorder %s26, %s27
    %p41 = scmp.eq.s32.totalorder %s19, 1
    %p42 = por %p40, %p41
    %p44 = scmp.ne.s32.totalorder %s27, %s43
    %p45 = scmp.eq.s32.totalorder %s19, 0
    %p46 = por %p44, %p45
    %s48 = sadd.s32 %s47, 1
    %p51 = scmp.eq.s32.totalorder %s13, 1
    %p52 = scmp.ne.s32.totalorder %s47, %s49
    %p53 = scmp.eq.s32.totalorder %s13, 0
    %p54 = por %p52, %p53
    %p55 = scmp.ne.s32.totalorder %s47, %s49
    %p56 = scmp.eq.s32.totalorder %s18, 1
    %p57 = por %p55, %p56
    %p58 = scmp.ne.s32.totalorder %s49, %s50
    %p59 = scmp.eq.s32.totalorder %s18, 0
    %p60 = por %p58, %p59
    %p61 = scmp.ne.s32.totalorder %s49, %s50
    %p62 = scmp.eq.s32.totalorder %s19, 1
    %p63 = por %p61, %p62
    %p65 = scmp.ne.s32.totalorder %s50, %s64
    %p66 = scmp.eq.s32.totalorder %s19, 0
    %p67 = por %p65, %p66
    %s69 = sadd.s32 %s68, 1
    %p72 = scmp.eq.s32.totalorder %s13, 1
    %p73 = scmp.ne.s32.totalorder %s68, %s70
    %p74 = scmp.eq.s32.totalorder %s13, 0
    %p75 = por %p73, %p74
    %p76 = scmp.ne.s32.totalorder %s68, %s70
    %p77 = scmp.eq.s32.totalorder %s18, 1
    %p78 = por %p76, %p77
    %p79 = scmp.ne.s32.totalorder %s70, %s71
    %p80 = scmp.eq.s32.totalorder %s18, 0
    %p81 = por %p79, %p80
    %p82 = scmp.ne.s32.totalorder %s70, %s71
    %p83 = scmp.eq.s32.totalorder %s19, 1
    %p84 = por %p82, %p83
    %p86 = scmp.ne.s32.totalorder %s71, %s85
    %p87 = scmp.eq.s32.totalorder %s19, 0
    %p88 = por %p86, %p87
    %s90 = sadd.s32 %s89, 1
    %p93 = scmp.eq.s32.totalorder %s13, 1
    %p94 = scmp.ne.s32.totalorder %s89, %s91
    %p95 = scmp.eq.s32.totalorder %s13, 0
    %p96 = por %p94, %p95
    %p97 = scmp.ne.s32.totalorder %s89, %s91
    %p98 = scmp.eq.s32.totalorder %s18, 1
    %p99 = por %p97, %p98
    %p100 = scmp.ne.s32.totalorder %s91, %s92
    %p101 = scmp.eq.s32.totalorder %s18, 0
    %p102 = por %p100, %p101
    %p103 = scmp.ne.s32.totalorder %s91, %s92
    %p104 = scmp.eq.s32.totalorder %s19, 1
    %p105 = por %p103, %p104
    %p107 = scmp.ne.s32.totalorder %s92, %s106
    %p108 = scmp.eq.s32.totalorder %s19, 0
    %p109 = por %p107, %p108
    %s110 = ssub.s32 %s13, %s20
    %p111 = scmp.eq.s32.totalorder %s110, 0
    %s113 = sadd.s32 %s112, 1
    %s114 = scalar_select %p111, %s112, %s113
    %p117 = pneg %p111
    %p118 = scmp.eq.s32.totalorder %s13, 1
    %p119 = por %p117, %p118
    %p120 = scmp.ne.s32.totalorder %s112, %s115
    %p121 = scmp.eq.s32.totalorder %s13, 0
    %p122 = por %p120, %p121
    %p123 = scmp.ne.s32.totalorder %s112, %s115
    %p124 = scmp.eq.s32.totalorder %s18, 1
    %p125 = por %p123, %p124
    %p126 = scmp.ne.s32.totalorder %s115, %s116
    %p127 = scmp.eq.s32.totalorder %s18, 0
    %p128 = por %p126, %p127
    %p129 = scmp.ne.s32.totalorder %s115, %s116
    %p130 = scmp.eq.s32.totalorder %s19, 1
    %p131 = por %p129, %p130
    %p133 = scmp.ne.s32.totalorder %s116, %s132
    %p134 = scmp.eq.s32.totalorder %s19, 0
    %p135 = por %p133, %p134
    %s136 = ssub.s32 %s13, %s20
    %p137 = scmp.eq.s32.totalorder %s136, 0
    %s139 = sadd.s32 %s138, 1
    %s140 = scalar_select %p137, %s138, %s139
    %p143 = pneg %p137
    %p144 = scmp.eq.s32.totalorder %s13, 1
    %p145 = por %p143, %p144
    %p146 = scmp.ne.s32.totalorder %s138, %s141
    %p147 = scmp.eq.s32.totalorder %s13, 0
    %p148 = por %p146, %p147
    %p149 = scmp.ne.s32.totalorder %s138, %s141
    %p150 = scmp.eq.s32.totalorder %s18, 1
    %p151 = por %p149, %p150
    %p152 = scmp.ne.s32.totalorder %s141, %s142
    %p153 = scmp.eq.s32.totalorder %s18, 0
    %p154 = por %p152, %p153
    %p155 = scmp.ne.s32.totalorder %s141, %s142
    %p156 = scmp.eq.s32.totalorder %s19, 1
    %p157 = por %p155, %p156
    %p159 = scmp.ne.s32.totalorder %s142, %s158
    %p160 = scmp.eq.s32.totalorder %s19, 0
    %p161 = por %p159, %p160
    %s162 = ssub.s32 %s13, %s20
    %p163 = scmp.eq.s32.totalorder %s162, 0
    %s165 = sadd.s32 %s164, 1
    %s166 = scalar_select %p163, %s164, %s165
    %p169 = pneg %p163
    %p170 = scmp.eq.s32.totalorder %s13, 1
    %p171 = por %p169, %p170
    %p172 = scmp.ne.s32.totalorder %s164, %s167
    %p173 = scmp.eq.s32.totalorder %s13, 0
    %p174 = por %p172, %p173
    %p175 = scmp.ne.s32.totalorder %s164, %s167
    %p176 = scmp.eq.s32.totalorder %s18, 1
    %p177 = por %p175, %p176
    %p178 = scmp.ne.s32.totalorder %s167, %s168
    %p179 = scmp.eq.s32.totalorder %s18, 0
    %p180 = por %p178, %p179
    %p181 = scmp.ne.s32.totalorder %s167, %s168
    %p182 = scmp.eq.s32.totalorder %s19, 1
    %p183 = por %p181, %p182
    %p185 = scmp.ne.s32.totalorder %s168, %s184
    %p186 = scmp.eq.s32.totalorder %s19, 0
    %p187 = por %p185, %p186
    %p188 = scmp.le.s32.totalorder 1, %s13
    %p189 = scmp.lt.s32.totalorder %s13, 3
    %p190 = pnand %p188, %p189
    %p191 = pneg %p190
    // Predicated region
    $region9: #{rrcnn_block_forward.7} parent=5 // pred_check
      _
    $region10: #{rrcnn_block_forward.7} parent=5 // pred_check_branch
      %193 = sbr.rel (%p190) target = $region12
    $region11: #{rrcnn_block_forward.7} parent=5 // pred_region
      %s194 = ssub.s32 %s13, 1
      // Predicated region
      $region13: #{rrcnn_block_forward.7} parent=11 // pred_check
        %p195 = pneg %p60
      $region14: #{rrcnn_block_forward.7} parent=11 // pred_check_branch
        %197 = sbr.rel (%p195) target = $region16
      $region15: #{rrcnn_block_forward.7} parent=11 // pred_region
        _
      $region16: #{rrcnn_block_forward.7} parent=11 // pred_fallthru
        _
      // Predicated region
      $region17: #{rrcnn_block_forward.7} parent=11 // pred_check
        %p198 = pneg %p81
      $region18: #{rrcnn_block_forward.7} parent=11 // pred_check_branch
        %200 = sbr.rel (%p198) target = $region20
      $region19: #{rrcnn_block_forward.7} parent=11 // pred_region
        _
      $region20: #{rrcnn_block_forward.7} parent=11 // pred_fallthru
        _
      // Predicated region
      $region21: #{rrcnn_block_forward.7} parent=11 // pred_check
        %p201 = pneg %p102
      $region22: #{rrcnn_block_forward.7} parent=11 // pred_check_branch
        %203 = sbr.rel (%p201) target = $region24
      $region23: #{rrcnn_block_forward.7} parent=11 // pred_region
        _
      $region24: #{rrcnn_block_forward.7} parent=11 // pred_fallthru
        _
    $region12: #{rrcnn_block_forward.7} parent=5 // pred_fallthru
      _
    %p204 = scmp.lt.s32.totalorder %s13, 2
    // Predicated region
    $region25: #{rrcnn_block_forward.7} parent=5 // pred_check
      %p205 = pneg %p204
    $region26: #{rrcnn_block_forward.7} parent=5 // pred_check_branch
      %207 = sbr.rel (%p205) target = $region28
    $region27: #{rrcnn_block_forward.7} parent=5 // pred_region
      // Predicated region
      $region29: #{rrcnn_block_forward.7} parent=27 // pred_check
        %p208 = pneg %p33
      $region30: #{rrcnn_block_forward.7} parent=27 // pred_check_branch
        %210 = sbr.rel (%p208) target = $region32
      $region31: #{rrcnn_block_forward.7} parent=27 // pred_region
        %p211 = scmp.lt.s32.totalorder %s13, 1
        %s212 = scalar_select %p211, %s13, 1
        %s213 = smul.addr %s212, 2
        %s214 = smul.addr %s213, 8
        %s215 = scalar_lea.vmem %s0, %s214
      $region32: #{rrcnn_block_forward.7} parent=27 // pred_fallthru
        _
    $region28: #{rrcnn_block_forward.7} parent=5 // pred_fallthru
      _
    %p216 = scmp.le.s32.totalorder 1, %s13
    %p217 = scmp.lt.s32.totalorder %s13, 3
    %p218 = pnand %p216, %p217
    %p219 = pneg %p218
    // Predicated region
    $region33: #{rrcnn_block_forward.7} parent=5 // pred_check
      _
    $region34: #{rrcnn_block_forward.7} parent=5 // pred_check_branch
      %221 = sbr.rel (%p218) target = $region36
    $region35: #{rrcnn_block_forward.7} parent=5 // pred_region
      %s222 = ssub.s32 %s13, 1
      %p223 = scmp.lt.s32.totalorder %s18, 1
      %s224 = scalar_select %p223, %s18, 1
      %s225 = smul.addr %s224, 2
      %s226 = smul.addr %s225, 8
      %s227 = scalar_lea.vmem %s0, %s226
      %p228 = pneg %p39
      %p229 = pneg %p36
      %p230 = pneg %p60
      %p231 = pneg %p57
      %p232 = pneg %p81
      %p233 = pneg %p78
      %p234 = pneg %p102
      %p235 = pneg %p99
      %p236 = pneg %p128
      %p237 = pneg %p125
      %p238 = scmp.lt.s32.totalorder %s18, 1
      %s239 = scalar_select %p238, %s18, 1
      %s240 = smul.addr %s239, 2
      %s241 = smul.addr %s240, 8
      %s242 = scalar_lea.vmem %s4, %s241
      %p243 = pneg %p154
      %p244 = pneg %p151
      %p245 = scmp.lt.s32.totalorder %s18, 1
      %s246 = scalar_select %p245, %s18, 1
      %s247 = smul.addr %s246, 8
      %s248 = scalar_lea.vmem %s5, %s247
      %p249 = pneg %p180
      %p250 = pneg %p177
      %p251 = scmp.lt.s32.totalorder %s18, 1
      %s252 = scalar_select %p251, %s18, 1
      %s253 = smul.addr %s252, 8
      %s254 = scalar_lea.vmem %s6, %s253
      %p255 = scmp.lt.s32.totalorder %s18, 1
      %s256 = scalar_select %p255, %s18, 1
      %s257 = smul.addr %s256, 2
      %s258 = smul.addr %s257, 8
      %s259 = scalar_lea.vmem %s0, %s258
      %p260 = scmp.lt.s32.totalorder %s18, 1
      %s261 = scalar_select %p260, %s18, 1
      %s262 = smul.addr %s261, 2
      %s263 = smul.addr %s262, 8
      %s264 = scalar_lea.vmem %s4, %s263
      %p265 = scmp.lt.s32.totalorder %s18, 1
      %s266 = scalar_select %p265, %s18, 1
      %s267 = smul.addr %s266, 8
      %s268 = scalar_lea.vmem %s5, %s267
      %p269 = scmp.lt.s32.totalorder %s18, 1
      %s270 = scalar_select %p269, %s18, 1
      %s271 = smul.addr %s270, 8
      %s272 = scalar_lea.vmem %s6, %s271
      %v274 = vld [vmem:[%s259] sm:$0xff]
      %v275 = vld [vmem:[%s259 + $0x8] sm:$0xff]
      %v276 = vld [vmem:[%s1] sm:$0xff]
      %278 = vset.pattern.permute.xlu0 0
      %279 = vperm.xlu0 %278, %v276
      %v280 = vpop.permute.xlu0 %279
      %v282 = vmul.f32 %v274, %v280
      %v283 = vmul.f32 %v275, %v280
      %v284 = vld [vmem:[%s2] sm:$0xff]
      %286 = vset.pattern.permute.xlu0 0
      %287 = vperm.xlu0 %286, %v284
      %v288 = vpop.permute.xlu0 %287
      %v290 = vadd.f32 %v282, %v288
      %v291 = vadd.f32 %v283, %v288
      %292 = vst [vmem:[#allocation2] sm:$0xff] 0.0
      %293 = vst [vmem:[#allocation2 + $0x8] sm:$0xff] 0.0
      %294 = vst [vmem:[#allocation2 + $0x10] sm:$0xff] 0.0
      %295 = vst [vmem:[#allocation2 + $0x18] sm:$0xff] 0.0
      %296 = vst [vmem:[#allocation2 + $0x8] sm:$0xff] %v290
      %297 = vst [vmem:[#allocation2 + $0x10] sm:$0xff] %v291
      %v298 = vlaneseq
      %v299 = vand.u32 %v298, 127
      %v300 = vadd.s32 %v299, 128
      %vm301 = vcmp.lt.s32.totalorder %v299, 0
      %v302 = vsub.s32 0, %v299
      %v303 = vsel %vm301, %v302, %v299
      %v304 = vshrl.u32 %v303, 4
      %v305 = vand.u32 %v303, 15
      %v306 = vsub.s32 0, %v305
      %v307 = vsel %vm301, %v306, %v305
      %vm308 = vcmp.lt.s32.totalorder %v300, 0
      %v309 = vsub.s32 0, %v300
      %v310 = vsel %vm308, %v309, %v300
      %v311 = vshrl.u32 %v310, 4
      %v312 = vand.u32 %v310, 15
      %v313 = vsub.s32 0, %v312
      %v314 = vsel %vm308, %v313, %v312
      %vm315 = vcmp.ne.s32.totalorder %v307, 0
      %vm316 = vcmp.ne.s32.totalorder %v314, 0
      %vm317 = vcmp.lt.s32.totalorder %v307, 0
      %vm318 = vcmp.lt.s32.totalorder %v314, 0
      %vm319 = vmand %vm317, %vm315
      %vm320 = vmand %vm318, %vm316
      %v321 = vadd.s32 %v307, 16
      %v322 = vadd.s32 %v314, 16
      %v323 = vsel %vm319, %v321, %v307
      %v324 = vsel %vm320, %v322, %v314
      %vm325 = vcmp.ne.s32.totalorder %v323, 0
      %vm326 = vcmp.ne.s32.totalorder %v324, 0
      %vm327 = vcmp.ne.s32.totalorder %v323, 15
      %vm328 = vcmp.ne.s32.totalorder %v324, 15
      %v329 = vld [vmem:[#allocation2] sm:$0xff]
      %v330 = vld [vmem:[#allocation2 + $0x8] sm:$0xff]
      %v331 = vld [vmem:[#allocation2 + $0x10] sm:$0xff]
      %v332 = vsel %vm325, 1, 0
      %v333 = vsel %vm326, 1, 0
      %vm334 = vcmp.eq.s32.totalorder %v332, 1
      %vm335 = vcmp.eq.s32.totalorder %v333, 1
      %339 = vrot.lane.b32.xlu0 %v329, 17
      %v340 = vpop.permute.xlu0 %339
      %341 = vrot.lane.b32.xlu0 %v330, 17
      %v342 = vpop.permute.xlu0 %341
      %343 = vrot.lane.b32.xlu0 %v331, 17
      %v344 = vpop.permute.xlu0 %343
      %vm345 = vcmask 138240
      %v346 = vsel %vm345, %v340, %v342
      %v347 = vsel %vm345, %v342, %v344
      %v350 = vsel %vm334, %v346, 0.0
      %v351 = vsel %vm335, %v347, 0.0
      %352 = vst [vmem:[#allocation3] sm:$0xff] %v350
      %353 = vst [vmem:[#allocation3 + $0x8] sm:$0xff] %v351
      %v354 = vld [vmem:[#allocation2] sm:$0xff]
      %v355 = vld [vmem:[#allocation2 + $0x8] sm:$0xff]
      %v356 = vld [vmem:[#allocation2 + $0x10] sm:$0xff]
      %360 = vrot.lane.b32.xlu0 %v354, 16
      %v361 = vpop.permute.xlu0 %360
      %362 = vrot.lane.b32.xlu0 %v355, 16
      %v363 = vpop.permute.xlu0 %362
      %364 = vrot.lane.b32.xlu0 %v356, 16
      %v365 = vpop.permute.xlu0 %364
      %vm366 = vcmask 130048
      %v367 = vsel %vm366, %v361, %v363
      %v368 = vsel %vm366, %v363, %v365
      %371 = vst [vmem:[#allocation3 + $0x10] sm:$0xff] %v367
      %372 = vst [vmem:[#allocation3 + $0x18] sm:$0xff] %v368
      %v373 = vld [vmem:[#allocation2] sm:$0xff]
      %v374 = vld [vmem:[#allocation2 + $0x8] sm:$0xff]
      %v375 = vld [vmem:[#allocation2 + $0x10] sm:$0xff]
      %v376 = vsel %vm327, 1, 0
      %v377 = vsel %vm328, 1, 0
      %vm378 = vcmp.eq.s32.totalorder %v376, 1
      %vm379 = vcmp.eq.s32.totalorder %v377, 1
      %383 = vrot.lane.b32.xlu0 %v373, 15
      %v384 = vpop.permute.xlu0 %383
      %385 = vrot.lane.b32.xlu0 %v374, 15
      %v386 = vpop.permute.xlu0 %385
      %387 = vrot.lane.b32.xlu0 %v375, 15
      %v388 = vpop.permute.xlu0 %387
      %vm389 = vcmask 121856
      %v390 = vsel %vm389, %v384, %v386
      %v391 = vsel %vm389, %v386, %v388
      %v394 = vsel %vm378, %v390, 0.0
      %v395 = vsel %vm379, %v391, 0.0
      %396 = vst [vmem:[#allocation3 + $0x20] sm:$0xff] %v394
      %397 = vst [vmem:[#allocation3 + $0x28] sm:$0xff] %v395
      %v398 = vld [vmem:[#allocation2] sm:$0xff]
      %v399 = vld [vmem:[#allocation2 + $0x8] sm:$0xff]
      %v400 = vld [vmem:[#allocation2 + $0x10] sm:$0xff]
      %404 = vrot.lane.b32.xlu0 %v398, 1
      %v405 = vpop.permute.xlu0 %404
      %406 = vrot.lane.b32.xlu0 %v399, 1
      %v407 = vpop.permute.xlu0 %406
      %408 = vrot.lane.b32.xlu0 %v400, 1
      %v409 = vpop.permute.xlu0 %408
      %vm410 = vcmask 7168
      %v411 = vsel %vm410, %v405, %v407
      %v412 = vsel %vm410, %v407, %v409
      %v415 = vsel %vm334, %v411, 0.0
      %v416 = vsel %vm335, %v412, 0.0
      %417 = vst [vmem:[#allocation3 + $0x30] sm:$0xff] %v415
      %418 = vst [vmem:[#allocation3 + $0x38] sm:$0xff] %v416
      %v419 = vld [vmem:[#allocation2 + $0x8] sm:$0xff]
      %v420 = vld [vmem:[#allocation2 + $0x10] sm:$0xff]
      %421 = vst [vmem:[#allocation3 + $0x40] sm:$0xff] %v419
      %422 = vst [vmem:[#allocation3 + $0x48] sm:$0xff] %v420
      %v423 = vld [vmem:[#allocation2 + $0x8] sm:$0xff]
      %v424 = vld [vmem:[#allocation2 + $0x10] sm:$0xff]
      %v425 = vld [vmem:[#allocation2 + $0x18] sm:$0xff]
      %429 = vrot.lane.b32.xlu0 %v423, 127
      %v430 = vpop.permute.xlu0 %429
      %431 = vrot.lane.b32.xlu0 %v424, 127
      %v432 = vpop.permute.xlu0 %431
      %433 = vrot.lane.b32.xlu0 %v425, 127
      %v434 = vpop.permute.xlu0 %433
      %vm435 = vcmask 1039360
      %v436 = vsel %vm435, %v430, %v432
      %v437 = vsel %vm435, %v432, %v434
      %v440 = vsel %vm378, %v436, 0.0
      %v441 = vsel %vm379, %v437, 0.0
      %442 = vst [vmem:[#allocation3 + $0x50] sm:$0xff] %v440
      %443 = vst [vmem:[#allocation3 + $0x58] sm:$0xff] %v441
      %v444 = vld [vmem:[#allocation2 + $0x8] sm:$0xff]
      %v445 = vld [vmem:[#allocation2 + $0x10] sm:$0xff]
      %v446 = vld [vmem:[#allocation2 + $0x18] sm:$0xff]
      %450 = vrot.lane.b32.xlu0 %v444, 113
      %v451 = vpop.permute.xlu0 %450
      %452 = vrot.lane.b32.xlu0 %v445, 113
      %v453 = vpop.permute.xlu0 %452
      %454 = vrot.lane.b32.xlu0 %v446, 113
      %v455 = vpop.permute.xlu0 %454
      %vm456 = vcmask 924672
      %v457 = vsel %vm456, %v451, %v453
      %v458 = vsel %vm456, %v453, %v455
      %v461 = vsel %vm334, %v457, 0.0
      %v462 = vsel %vm335, %v458, 0.0
      %463 = vst [vmem:[#allocation3 + $0x60] sm:$0xff] %v461
      %464 = vst [vmem:[#allocation3 + $0x68] sm:$0xff] %v462
      %v465 = vld [vmem:[#allocation2 + $0x8] sm:$0xff]
      %v466 = vld [vmem:[#allocation2 + $0x10] sm:$0xff]
      %v467 = vld [vmem:[#allocation2 + $0x18] sm:$0xff]
      %471 = vrot.lane.b32.xlu0 %v465, 112
      %v472 = vpop.permute.xlu0 %471
      %473 = vrot.lane.b32.xlu0 %v466, 112
      %v474 = vpop.permute.xlu0 %473
      %475 = vrot.lane.b32.xlu0 %v467, 112
      %v476 = vpop.permute.xlu0 %475
      %vm477 = vcmask 916480
      %v478 = vsel %vm477, %v472, %v474
      %v479 = vsel %vm477, %v474, %v476
      %482 = vst [vmem:[#allocation3 + $0x70] sm:$0xff] %v478
      %483 = vst [vmem:[#allocation3 + $0x78] sm:$0xff] %v479
      %v484 = vld [vmem:[#allocation2 + $0x8] sm:$0xff]
      %v485 = vld [vmem:[#allocation2 + $0x10] sm:$0xff]
      %v486 = vld [vmem:[#allocation2 + $0x18] sm:$0xff]
      %490 = vrot.lane.b32.xlu0 %v484, 111
      %v491 = vpop.permute.xlu0 %490
      %492 = vrot.lane.b32.xlu0 %v485, 111
      %v493 = vpop.permute.xlu0 %492
      %494 = vrot.lane.b32.xlu0 %v486, 111
      %v495 = vpop.permute.xlu0 %494
      %vm496 = vcmask 908288
      %v497 = vsel %vm496, %v491, %v493
      %v498 = vsel %vm496, %v493, %v495
      %v501 = vsel %vm378, %v497, 0.0
      %v502 = vsel %vm379, %v498, 0.0
      %503 = vst [vmem:[#allocation3 + $0x80] sm:$0xff] %v501
      %504 = vst [vmem:[#allocation3 + $0x88] sm:$0xff] %v502
      %v505 = vld [vmem:[%s3] sm:$0xf]
      %v506 = vld [vmem:[#allocation3] sm:$0xff]
      %v507 = vld [vmem:[#allocation3 + $0x8] sm:$0xff]
      %v508 = vld [vmem:[#allocation3 + $0x10] sm:$0xff]
      %v509 = vld [vmem:[#allocation3 + $0x18] sm:$0xff]
      %v510 = vld [vmem:[#allocation3 + $0x20] sm:$0xff]
      %v511 = vld [vmem:[#allocation3 + $0x28] sm:$0xff]
      %v512 = vld [vmem:[#allocation3 + $0x30] sm:$0xff]
      %v513 = vld [vmem:[#allocation3 + $0x38] sm:$0xff]
      %v514 = vld [vmem:[#allocation3 + $0x40] sm:$0xff]
      %v515 = vld [vmem:[#allocation3 + $0x48] sm:$0xff]
      %v516 = vld [vmem:[#allocation3 + $0x50] sm:$0xff]
      %v517 = vld [vmem:[#allocation3 + $0x58] sm:$0xff]
      %v518 = vld [vmem:[#allocation3 + $0x60] sm:$0xff]
      %v519 = vld [vmem:[#allocation3 + $0x68] sm:$0xff]
      %v520 = vld [vmem:[#allocation3 + $0x70] sm:$0xff]
      %v521 = vld [vmem:[#allocation3 + $0x78] sm:$0xff]
      %v522 = vld [vmem:[#allocation3 + $0x80] sm:$0xff]
      %v523 = vld [vmem:[#allocation3 + $0x88] sm:$0xff]
      %v524 = vpack.c.bf16 %v508, %v506
      %v525 = vpack.c.bf16 %v509, %v507
      %v526 = vpack.c.bf16 %v512, %v510
      %v527 = vpack.c.bf16 %v513, %v511
      %v528 = vpack.c.bf16 %v516, %v514
      %v529 = vpack.c.bf16 %v517, %v515
      %v530 = vpack.c.bf16 %v520, %v518
      %v531 = vpack.c.bf16 %v521, %v519
      %v532 = vpack.c.bf16 %v522, %v522
      %v533 = vpack.c.bf16 %v523, %v523
      %vm534 = vcmask 588800
      %v536 = vsel %vm534, %v505, 0
      %vm538 = vcmask 1043456
      %v540 = vsel %vm538, %v532, 0
      %v543 = vsel %vm538, %v533, 0
      %545 = vmatprep.subr.bf16.mxu0 %v525
      %546 = vmatpush1.bf16.msra.mxu0 %v524
      %547 = vmatprep.subr.bf16.mxu0 %v527
      %548 = vmatpush1.bf16.msra.mxu0 %v526
      %549 = vmatprep.subr.bf16.mxu0 %v529
      %550 = vmatpush1.bf16.msra.mxu0 %v528
      %551 = vmatprep.subr.bf16.mxu0 %v531
      %552 = vmatpush1.bf16.msra.mxu0 %v530
      %553 = vmatprep.subr.bf16.mxu0 %v543
      %554 = vmatpush1.bf16.msra.mxu0 %v540
      %555 = vmatprep.subr.bf16.mxu0 0
      %556 = vmatpush1.bf16.msra.mxu0 0
      %557 = vmatprep.subr.bf16.mxu0 0
      %558 = vmatpush1.bf16.msra.mxu0 0
      %559 = vmatprep.subr.bf16.mxu0 0
      %560 = vmatpush1.bf16.msra.mxu0 0
      %561 = vmatprep.subr.bf16.mxu0 0
      %562 = vmatpush1.bf16.msra.mxu0 0
      %563 = vmatprep.subr.bf16.mxu0 0
      %564 = vmatpush1.bf16.msra.mxu0 0
      %565 = vmatprep.subr.bf16.mxu0 0
      %566 = vmatpush1.bf16.msra.mxu0 0
      %567 = vmatprep.subr.bf16.mxu0 0
      %568 = vmatpush1.bf16.msra.mxu0 0
      %569 = vmatprep.subr.bf16.mxu0 0
      %570 = vmatpush1.bf16.msra.mxu0 0
      %571 = vmatprep.subr.bf16.mxu0 0
      %572 = vmatpush1.bf16.msra.mxu0 0
      %573 = vmatprep.subr.bf16.mxu0 0
      %574 = vmatpush1.bf16.msra.mxu0 0
      %575 = vmatprep.subr.bf16.mxu0 0
      %576 = vmatpush1.bf16.msra.mxu0 0
      %577 = vmatprep.mubr.bf16.mxu0 0
      %578 = vmatmul.mubr.bf16.gmra.mrb[0].mxu0 %v536
      %v579 = vpop.f32.mrb[0].mxu0
      %v580 = vadd.f32 0.0, %v579
      %v581 = vpop.f32.mrb[0].mxu0
      %v582 = vadd.f32 0.0, %v581
      %v583 = vpop.f32.mrb[0].mxu0
      %v584 = vpop.f32.mrb[0].mxu0
      %585 = vdwg.mxu0
      %586 = vst [vmem:[%s264] sm:$0xff] %v580
      %587 = vst [vmem:[%s264 + $0x8] sm:$0xff] %v582
      %v588 = vadd.f32 %v580, %v582
      %589 = vadd.xlane.f32.xlu0 %v588
      %v590 = vpop.xlane.xlu0 %589
      %591 = vst.msk [vmem:[%s268] sm:$0xff] %vm410, %v590
      %v592 = vmul.f32 %v580, %v580
      %v593 = vmul.f32 %v582, %v582
      %v594 = vadd.f32 %v592, %v593
      %595 = vadd.xlane.f32.xlu0 %v594
      %v596 = vpop.xlane.xlu0 %595
      %597 = vst.msk [vmem:[%s272] sm:$0xff] %vm410, %v596
      %p598 = scmp.lt.s32.totalorder %s18, 1
      %s599 = scalar_select %p598, %s18, 1
      %s600 = smul.addr %s599, 2
      %s601 = smul.addr %s600, 8
      %s602 = scalar_lea.vmem %s4, %s601
      %p603 = scmp.lt.s32.totalorder %s18, 1
      %s604 = scalar_select %p603, %s18, 1
      %s605 = smul.addr %s604, 8
      %s606 = scalar_lea.vmem %s5, %s605
      %p607 = scmp.lt.s32.totalorder %s18, 1
      %s608 = scalar_select %p607, %s18, 1
      %s609 = smul.addr %s608, 8
      %s610 = scalar_lea.vmem %s6, %s609
      // Predicated region
      $region37: #{rrcnn_block_forward.7} parent=35 // pred_check
        %p611 = pneg %p125
      $region38: #{rrcnn_block_forward.7} parent=35 // pred_check_branch
        %613 = sbr.rel (%p611) target = $region40
      $region39: #{rrcnn_block_forward.7} parent=35 // pred_region
        _
      $region40: #{rrcnn_block_forward.7} parent=35 // pred_fallthru
        _
      // Predicated region
      $region41: #{rrcnn_block_forward.7} parent=35 // pred_check
        %p614 = pneg %p151
      $region42: #{rrcnn_block_forward.7} parent=35 // pred_check_branch
        %616 = sbr.rel (%p614) target = $region44
      $region43: #{rrcnn_block_forward.7} parent=35 // pred_region
        _
      $region44: #{rrcnn_block_forward.7} parent=35 // pred_fallthru
        _
      // Predicated region
      $region45: #{rrcnn_block_forward.7} parent=35 // pred_check
        %p617 = pneg %p177
      $region46: #{rrcnn_block_forward.7} parent=35 // pred_check_branch
        %619 = sbr.rel (%p617) target = $region48
      $region47: #{rrcnn_block_forward.7} parent=35 // pred_region
        _
      $region48: #{rrcnn_block_forward.7} parent=35 // pred_fallthru
        _
    $region36: #{rrcnn_block_forward.7} parent=5 // pred_fallthru
      _
    %p620 = scmp.le.s32.totalorder 2, %s13
    // Predicated region
    $region49: #{rrcnn_block_forward.7} parent=5 // pred_check
      %p621 = pneg %p620
    $region50: #{rrcnn_block_forward.7} parent=5 // pred_check_branch
      %623 = sbr.rel (%p621) target = $region52
    $region51: #{rrcnn_block_forward.7} parent=5 // pred_region
      %s624 = ssub.s32 %s13, 2
      // Predicated region
      $region53: #{rrcnn_block_forward.7} parent=51 // pred_check
        %p625 = pneg %p131
      $region54: #{rrcnn_block_forward.7} parent=51 // pred_check_branch
        %627 = sbr.rel (%p625) target = $region56
      $region55: #{rrcnn_block_forward.7} parent=51 // pred_region
        %p628 = scmp.lt.s32.totalorder %s19, 1
        %s629 = scalar_select %p628, %s19, 1
        %s630 = smul.addr %s629, 2
        %s631 = smul.addr %s630, 8
        %s632 = scalar_lea.vmem %s4, %s631
      $region56: #{rrcnn_block_forward.7} parent=51 // pred_fallthru
        _
      // Predicated region
      $region57: #{rrcnn_block_forward.7} parent=51 // pred_check
        %p633 = pneg %p157
      $region58: #{rrcnn_block_forward.7} parent=51 // pred_check_branch
        %635 = sbr.rel (%p633) target = $region60
      $region59: #{rrcnn_block_forward.7} parent=51 // pred_region
        %p636 = scmp.lt.s32.totalorder %s19, 1
        %s637 = scalar_select %p636, %s19, 1
        %s638 = smul.addr %s637, 8
        %s639 = scalar_lea.vmem %s5, %s638
      $region60: #{rrcnn_block_forward.7} parent=51 // pred_fallthru
        _
      // Predicated region
      $region61: #{rrcnn_block_forward.7} parent=51 // pred_check
        %p640 = pneg %p183
      $region62: #{rrcnn_block_forward.7} parent=51 // pred_check_branch
        %642 = sbr.rel (%p640) target = $region64
      $region63: #{rrcnn_block_forward.7} parent=51 // pred_region
        %p643 = scmp.lt.s32.totalorder %s19, 1
        %s644 = scalar_select %p643, %s19, 1
        %s645 = smul.addr %s644, 8
        %s646 = scalar_lea.vmem %s6, %s645
      $region64: #{rrcnn_block_forward.7} parent=51 // pred_fallthru
        _
    $region52: #{rrcnn_block_forward.7} parent=5 // pred_fallthru
      _
  $region6: #{rrcnn_block_forward.7} parent=0 // loop_footer
    %s17 = sadd.s32 1, %s13
  $region7: #{rrcnn_block_forward.7} parent=0 // loop_footer_branch
    %12 = sbr.rel target = $region3
  $region8: #{rrcnn_block_forward.7} parent=0 // loop_exit
    _

// kernel: rrcnn_block_forward.8
$region0: #{rrcnn_block_forward.8}
  #allocation0 [shape = 'u32[]', space=smem, size = 0x4, offset = 0x4, fixed_abs, tag = 'smem constant byte address 0x4 - core index']
  #allocation1 [shape = 'u32[144,128]{1,0:T(1,128)}', space=vmem, size = 0x12000, scoped, tag = 'internal scratch']
  #allocation2 [shape = 'f32[8,512]{1,0:T(8,128)}', space=vmem, size = 0x4000, scoped, tag = 'scratch operand']
  #allocation3 [shape = 'f32[72,256]{1,0:T(8,128)}', space=vmem, size = 0x12000, scoped, tag = 'scratch operand']
  %s0 = inlined_call_operand.vmem [shape: f32[2,8,256], index: 0, kind: input, shape index: {}]
  %s1 = inlined_call_operand.vmem [shape: f32[8,1], index: 1, kind: input, shape index: {}]
  %s2 = inlined_call_operand.vmem [shape: f32[8,1], index: 2, kind: input, shape index: {}]
  %s3 = inlined_call_operand.vmem [shape: bf16[8,72], index: 3, kind: input, shape index: {}]
  %s4 = inlined_call_operand.vmem [shape: f32[2,8,256], index: 4, kind: output, shape index: {0}]
  %s5 = inlined_call_operand.vmem [shape: f32[2,8,1], index: 5, kind: output, shape index: {1}]
  %s6 = inlined_call_operand.vmem [shape: f32[2,8,1], index: 6, kind: output, shape index: {2}]
  %7 = xla_tuple %s4, %s5, %s6
  %s8 = sld [smem:[#allocation0]]
  $region65: #{rrcnn_block_forward.8} parent=0
    _
  %s10 = ssub.s32 1, %s8
  %s11 = scalar_select 0, %s10, %s8
  loop: start=0, step=1, limit=4
  $region2: #{rrcnn_block_forward.8} parent=0 // loop_pre_header
    _
  $region3: #{rrcnn_block_forward.8} parent=0 // loop_header
    %s13 = sphi 0, %s17
    %p14 = scmp.ge.s32.totalorder %s13, 4
    %s23 = sphi 0, %s25
    %s26 = sphi 0, %s23
    %s27 = sphi 0, %s26
    %s43 = sphi 0, %s27
    %s47 = sphi 0, %s47
    %s49 = sphi 0, %s47
    %s50 = sphi 0, %s49
    %s64 = sphi 0, %s50
    %s68 = sphi 0, %s68
    %s70 = sphi 0, %s68
    %s71 = sphi 0, %s70
    %s85 = sphi 0, %s71
    %s89 = sphi 0, %s89
    %s91 = sphi 0, %s89
    %s92 = sphi 0, %s91
    %s106 = sphi 0, %s92
    %s112 = sphi 0, %s114
    %s115 = sphi 0, %s112
    %s116 = sphi 0, %s115
    %s132 = sphi 0, %s116
    %s138 = sphi 0, %s140
    %s141 = sphi 0, %s138
    %s142 = sphi 0, %s141
    %s158 = sphi 0, %s142
    %s164 = sphi 0, %s166
    %s167 = sphi 0, %s164
    %s168 = sphi 0, %s167
    %s184 = sphi 0, %s168
  $region4: #{rrcnn_block_forward.8} parent=0 // loop_header_branch
    %16 = sbr.rel (%p14) target = $region8
  $region5: #{rrcnn_block_forward.8} parent=0 // loop_body
    %s18 = ssub.s32 %s13, 1
    %s19 = ssub.s32 %s13, 2
    %s20 = sadd.s32 %s13, 1
    %s21 = ssub.s32 %s13, %s20
    %p22 = scmp.eq.s32.totalorder %s21, 0
    %s24 = sadd.s32 %s23, 1
    %s25 = scalar_select %p22, %s23, %s24
    %p28 = pneg %p22
    %p29 = scmp.eq.s32.totalorder %s13, 1
    %p30 = por %p28, %p29
    %p31 = scmp.ne.s32.totalorder %s23, %s26
    %p32 = scmp.eq.s32.totalorder %s13, 0
    %p33 = por %p31, %p32
    %p34 = scmp.ne.s32.totalorder %s23, %s26
    %p35 = scmp.eq.s32.totalorder %s18, 1
    %p36 = por %p34, %p35
    %p37 = scmp.ne.s32.totalorder %s26, %s27
    %p38 = scmp.eq.s32.totalorder %s18, 0
    %p39 = por %p37, %p38
    %p40 = scmp.ne.s32.totalorder %s26, %s27
    %p41 = scmp.eq.s32.totalorder %s19, 1
    %p42 = por %p40, %p41
    %p44 = scmp.ne.s32.totalorder %s27, %s43
    %p45 = scmp.eq.s32.totalorder %s19, 0
    %p46 = por %p44, %p45
    %s48 = sadd.s32 %s47, 1
    %p51 = scmp.eq.s32.totalorder %s13, 1
    %p52 = scmp.ne.s32.totalorder %s47, %s49
    %p53 = scmp.eq.s32.totalorder %s13, 0
    %p54 = por %p52, %p53
    %p55 = scmp.ne.s32.totalorder %s47, %s49
    %p56 = scmp.eq.s32.totalorder %s18, 1
    %p57 = por %p55, %p56
    %p58 = scmp.ne.s32.totalorder %s49, %s50
    %p59 = scmp.eq.s32.totalorder %s18, 0
    %p60 = por %p58, %p59
    %p61 = scmp.ne.s32.totalorder %s49, %s50
    %p62 = scmp.eq.s32.totalorder %s19, 1
    %p63 = por %p61, %p62
    %p65 = scmp.ne.s32.totalorder %s50, %s64
    %p66 = scmp.eq.s32.totalorder %s19, 0
    %p67 = por %p65, %p66
    %s69 = sadd.s32 %s68, 1
    %p72 = scmp.eq.s32.totalorder %s13, 1
    %p73 = scmp.ne.s32.totalorder %s68, %s70
    %p74 = scmp.eq.s32.totalorder %s13, 0
    %p75 = por %p73, %p74
    %p76 = scmp.ne.s32.totalorder %s68, %s70
    %p77 = scmp.eq.s32.totalorder %s18, 1
    %p78 = por %p76, %p77
    %p79 = scmp.ne.s32.totalorder %s70, %s71
    %p80 = scmp.eq.s32.totalorder %s18, 0
    %p81 = por %p79, %p80
    %p82 = scmp.ne.s32.totalorder %s70, %s71
    %p83 = scmp.eq.s32.totalorder %s19, 1
    %p84 = por %p82, %p83
    %p86 = scmp.ne.s32.totalorder %s71, %s85
    %p87 = scmp.eq.s32.totalorder %s19, 0
    %p88 = por %p86, %p87
    %s90 = sadd.s32 %s89, 1
    %p93 = scmp.eq.s32.totalorder %s13, 1
    %p94 = scmp.ne.s32.totalorder %s89, %s91
    %p95 = scmp.eq.s32.totalorder %s13, 0
    %p96 = por %p94, %p95
    %p97 = scmp.ne.s32.totalorder %s89, %s91
    %p98 = scmp.eq.s32.totalorder %s18, 1
    %p99 = por %p97, %p98
    %p100 = scmp.ne.s32.totalorder %s91, %s92
    %p101 = scmp.eq.s32.totalorder %s18, 0
    %p102 = por %p100, %p101
    %p103 = scmp.ne.s32.totalorder %s91, %s92
    %p104 = scmp.eq.s32.totalorder %s19, 1
    %p105 = por %p103, %p104
    %p107 = scmp.ne.s32.totalorder %s92, %s106
    %p108 = scmp.eq.s32.totalorder %s19, 0
    %p109 = por %p107, %p108
    %s110 = ssub.s32 %s13, %s20
    %p111 = scmp.eq.s32.totalorder %s110, 0
    %s113 = sadd.s32 %s112, 1
    %s114 = scalar_select %p111, %s112, %s113
    %p117 = pneg %p111
    %p118 = scmp.eq.s32.totalorder %s13, 1
    %p119 = por %p117, %p118
    %p120 = scmp.ne.s32.totalorder %s112, %s115
    %p121 = scmp.eq.s32.totalorder %s13, 0
    %p122 = por %p120, %p121
    %p123 = scmp.ne.s32.totalorder %s112, %s115
    %p124 = scmp.eq.s32.totalorder %s18, 1
    %p125 = por %p123, %p124
    %p126 = scmp.ne.s32.totalorder %s115, %s116
    %p127 = scmp.eq.s32.totalorder %s18, 0
    %p128 = por %p126, %p127
    %p129 = scmp.ne.s32.totalorder %s115, %s116
    %p130 = scmp.eq.s32.totalorder %s19, 1
    %p131 = por %p129, %p130
    %p133 = scmp.ne.s32.totalorder %s116, %s132
    %p134 = scmp.eq.s32.totalorder %s19, 0
    %p135 = por %p133, %p134
    %s136 = ssub.s32 %s13, %s20
    %p137 = scmp.eq.s32.totalorder %s136, 0
    %s139 = sadd.s32 %s138, 1
    %s140 = scalar_select %p137, %s138, %s139
    %p143 = pneg %p137
    %p144 = scmp.eq.s32.totalorder %s13, 1
    %p145 = por %p143, %p144
    %p146 = scmp.ne.s32.totalorder %s138, %s141
    %p147 = scmp.eq.s32.totalorder %s13, 0
    %p148 = por %p146, %p147
    %p149 = scmp.ne.s32.totalorder %s138, %s141
    %p150 = scmp.eq.s32.totalorder %s18, 1
    %p151 = por %p149, %p150
    %p152 = scmp.ne.s32.totalorder %s141, %s142
    %p153 = scmp.eq.s32.totalorder %s18, 0
    %p154 = por %p152, %p153
    %p155 = scmp.ne.s32.totalorder %s141, %s142
    %p156 = scmp.eq.s32.totalorder %s19, 1
    %p157 = por %p155, %p156
    %p159 = scmp.ne.s32.totalorder %s142, %s158
    %p160 = scmp.eq.s32.totalorder %s19, 0
    %p161 = por %p159, %p160
    %s162 = ssub.s32 %s13, %s20
    %p163 = scmp.eq.s32.totalorder %s162, 0
    %s165 = sadd.s32 %s164, 1
    %s166 = scalar_select %p163, %s164, %s165
    %p169 = pneg %p163
    %p170 = scmp.eq.s32.totalorder %s13, 1
    %p171 = por %p169, %p170
    %p172 = scmp.ne.s32.totalorder %s164, %s167
    %p173 = scmp.eq.s32.totalorder %s13, 0
    %p174 = por %p172, %p173
    %p175 = scmp.ne.s32.totalorder %s164, %s167
    %p176 = scmp.eq.s32.totalorder %s18, 1
    %p177 = por %p175, %p176
    %p178 = scmp.ne.s32.totalorder %s167, %s168
    %p179 = scmp.eq.s32.totalorder %s18, 0
    %p180 = por %p178, %p179
    %p181 = scmp.ne.s32.totalorder %s167, %s168
    %p182 = scmp.eq.s32.totalorder %s19, 1
    %p183 = por %p181, %p182
    %p185 = scmp.ne.s32.totalorder %s168, %s184
    %p186 = scmp.eq.s32.totalorder %s19, 0
    %p187 = por %p185, %p186
    %p188 = scmp.le.s32.totalorder 1, %s13
    %p189 = scmp.lt.s32.totalorder %s13, 3
    %p190 = pnand %p188, %p189
    %p191 = pneg %p190
    // Predicated region
    $region9: #{rrcnn_block_forward.8} parent=5 // pred_check
      _
    $region10: #{rrcnn_block_forward.8} parent=5 // pred_check_branch
      %193 = sbr.rel (%p190) target = $region12
    $region11: #{rrcnn_block_forward.8} parent=5 // pred_region
      %s194 = ssub.s32 %s13, 1
      // Predicated region
      $region13: #{rrcnn_block_forward.8} parent=11 // pred_check
        %p195 = pneg %p60
      $region14: #{rrcnn_block_forward.8} parent=11 // pred_check_branch
        %197 = sbr.rel (%p195) target = $region16
      $region15: #{rrcnn_block_forward.8} parent=11 // pred_region
        _
      $region16: #{rrcnn_block_forward.8} parent=11 // pred_fallthru
        _
      // Predicated region
      $region17: #{rrcnn_block_forward.8} parent=11 // pred_check
        %p198 = pneg %p81
      $region18: #{rrcnn_block_forward.8} parent=11 // pred_check_branch
        %200 = sbr.rel (%p198) target = $region20
      $region19: #{rrcnn_block_forward.8} parent=11 // pred_region
        _
      $region20: #{rrcnn_block_forward.8} parent=11 // pred_fallthru
        _
      // Predicated region
      $region21: #{rrcnn_block_forward.8} parent=11 // pred_check
        %p201 = pneg %p102
      $region22: #{rrcnn_block_forward.8} parent=11 // pred_check_branch
        %203 = sbr.rel (%p201) target = $region24
      $region23: #{rrcnn_block_forward.8} parent=11 // pred_region
        _
      $region24: #{rrcnn_block_forward.8} parent=11 // pred_fallthru
        _
    $region12: #{rrcnn_block_forward.8} parent=5 // pred_fallthru
      _
    %p204 = scmp.lt.s32.totalorder %s13, 2
    // Predicated region
    $region25: #{rrcnn_block_forward.8} parent=5 // pred_check
      %p205 = pneg %p204
    $region26: #{rrcnn_block_forward.8} parent=5 // pred_check_branch
      %207 = sbr.rel (%p205) target = $region28
    $region27: #{rrcnn_block_forward.8} parent=5 // pred_region
      // Predicated region
      $region29: #{rrcnn_block_forward.8} parent=27 // pred_check
        %p208 = pneg %p33
      $region30: #{rrcnn_block_forward.8} parent=27 // pred_check_branch
        %210 = sbr.rel (%p208) target = $region32
      $region31: #{rrcnn_block_forward.8} parent=27 // pred_region
        %p211 = scmp.lt.s32.totalorder %s13, 1
        %s212 = scalar_select %p211, %s13, 1
        %s213 = smul.addr %s212, 2
        %s214 = smul.addr %s213, 8
        %s215 = scalar_lea.vmem %s0, %s214
      $region32: #{rrcnn_block_forward.8} parent=27 // pred_fallthru
        _
    $region28: #{rrcnn_block_forward.8} parent=5 // pred_fallthru
      _
    %p216 = scmp.le.s32.totalorder 1, %s13
    %p217 = scmp.lt.s32.totalorder %s13, 3
    %p218 = pnand %p216, %p217
    %p219 = pneg %p218
    // Predicated region
    $region33: #{rrcnn_block_forward.8} parent=5 // pred_check
      _
    $region34: #{rrcnn_block_forward.8} parent=5 // pred_check_branch
      %221 = sbr.rel (%p218) target = $region36
    $region35: #{rrcnn_block_forward.8} parent=5 // pred_region
      %s222 = ssub.s32 %s13, 1
      %p223 = scmp.lt.s32.totalorder %s18, 1
      %s224 = scalar_select %p223, %s18, 1
      %s225 = smul.addr %s224, 2
      %s226 = smul.addr %s225, 8
      %s227 = scalar_lea.vmem %s0, %s226
      %p228 = pneg %p39
      %p229 = pneg %p36
      %p230 = pneg %p60
      %p231 = pneg %p57
      %p232 = pneg %p81
      %p233 = pneg %p78
      %p234 = pneg %p102
      %p235 = pneg %p99
      %p236 = pneg %p128
      %p237 = pneg %p125
      %p238 = scmp.lt.s32.totalorder %s18, 1
      %s239 = scalar_select %p238, %s18, 1
      %s240 = smul.addr %s239, 2
      %s241 = smul.addr %s240, 8
      %s242 = scalar_lea.vmem %s4, %s241
      %p243 = pneg %p154
      %p244 = pneg %p151
      %p245 = scmp.lt.s32.totalorder %s18, 1
      %s246 = scalar_select %p245, %s18, 1
      %s247 = smul.addr %s246, 8
      %s248 = scalar_lea.vmem %s5, %s247
      %p249 = pneg %p180
      %p250 = pneg %p177
      %p251 = scmp.lt.s32.totalorder %s18, 1
      %s252 = scalar_select %p251, %s18, 1
      %s253 = smul.addr %s252, 8
      %s254 = scalar_lea.vmem %s6, %s253
      %p255 = scmp.lt.s32.totalorder %s18, 1
      %s256 = scalar_select %p255, %s18, 1
      %s257 = smul.addr %s256, 2
      %s258 = smul.addr %s257, 8
      %s259 = scalar_lea.vmem %s0, %s258
      %p260 = scmp.lt.s32.totalorder %s18, 1
      %s261 = scalar_select %p260, %s18, 1
      %s262 = smul.addr %s261, 2
      %s263 = smul.addr %s262, 8
      %s264 = scalar_lea.vmem %s4, %s263
      %p265 = scmp.lt.s32.totalorder %s18, 1
      %s266 = scalar_select %p265, %s18, 1
      %s267 = smul.addr %s266, 8
      %s268 = scalar_lea.vmem %s5, %s267
      %p269 = scmp.lt.s32.totalorder %s18, 1
      %s270 = scalar_select %p269, %s18, 1
      %s271 = smul.addr %s270, 8
      %s272 = scalar_lea.vmem %s6, %s271
      %v274 = vld [vmem:[%s259] sm:$0xff]
      %v275 = vld [vmem:[%s259 + $0x8] sm:$0xff]
      %v276 = vld [vmem:[%s1] sm:$0xff]
      %278 = vset.pattern.permute.xlu0 0
      %279 = vperm.xlu0 %278, %v276
      %v280 = vpop.permute.xlu0 %279
      %v282 = vmul.f32 %v274, %v280
      %v283 = vmul.f32 %v275, %v280
      %v284 = vld [vmem:[%s2] sm:$0xff]
      %286 = vset.pattern.permute.xlu0 0
      %287 = vperm.xlu0 %286, %v284
      %v288 = vpop.permute.xlu0 %287
      %v290 = vadd.f32 %v282, %v288
      %v291 = vadd.f32 %v283, %v288
      %v292 = vmax.f32 %v290, 0.0
      %v293 = vmax.f32 %v291, 0.0
      %294 = vst [vmem:[#allocation2] sm:$0xff] 0.0
      %295 = vst [vmem:[#allocation2 + $0x8] sm:$0xff] 0.0
      %296 = vst [vmem:[#allocation2 + $0x10] sm:$0xff] 0.0
      %297 = vst [vmem:[#allocation2 + $0x18] sm:$0xff] 0.0
      %298 = vst [vmem:[#allocation2 + $0x8] sm:$0xff] %v292
      %299 = vst [vmem:[#allocation2 + $0x10] sm:$0xff] %v293
      %v300 = vlaneseq
      %v301 = vand.u32 %v300, 127
      %v302 = vadd.s32 %v301, 128
      %vm303 = vcmp.lt.s32.totalorder %v301, 0
      %v304 = vsub.s32 0, %v301
      %v305 = vsel %vm303, %v304, %v301
      %v306 = vshrl.u32 %v305, 4
      %v307 = vand.u32 %v305, 15
      %v308 = vsub.s32 0, %v307
      %v309 = vsel %vm303, %v308, %v307
      %vm310 = vcmp.lt.s32.totalorder %v302, 0
      %v311 = vsub.s32 0, %v302
      %v312 = vsel %vm310, %v311, %v302
      %v313 = vshrl.u32 %v312, 4
      %v314 = vand.u32 %v312, 15
      %v315 = vsub.s32 0, %v314
      %v316 = vsel %vm310, %v315, %v314
      %vm317 = vcmp.ne.s32.totalorder %v309, 0
      %vm318 = vcmp.ne.s32.totalorder %v316, 0
      %vm319 = vcmp.lt.s32.totalorder %v309, 0
      %vm320 = vcmp.lt.s32.totalorder %v316, 0
      %vm321 = vmand %vm319, %vm317
      %vm322 = vmand %vm320, %vm318
      %v323 = vadd.s32 %v309, 16
      %v324 = vadd.s32 %v316, 16
      %v325 = vsel %vm321, %v323, %v309
      %v326 = vsel %vm322, %v324, %v316
      %vm327 = vcmp.ne.s32.totalorder %v325, 0
      %vm328 = vcmp.ne.s32.totalorder %v326, 0
      %vm329 = vcmp.ne.s32.totalorder %v325, 15
      %vm330 = vcmp.ne.s32.totalorder %v326, 15
      %v331 = vld [vmem:[#allocation2] sm:$0xff]
      %v332 = vld [vmem:[#allocation2 + $0x8] sm:$0xff]
      %v333 = vld [vmem:[#allocation2 + $0x10] sm:$0xff]
      %v334 = vsel %vm327, 1, 0
      %v335 = vsel %vm328, 1, 0
      %vm336 = vcmp.eq.s32.totalorder %v334, 1
      %vm337 = vcmp.eq.s32.totalorder %v335, 1
      %341 = vrot.lane.b32.xlu0 %v331, 17
      %v342 = vpop.permute.xlu0 %341
      %343 = vrot.lane.b32.xlu0 %v332, 17
      %v344 = vpop.permute.xlu0 %343
      %345 = vrot.lane.b32.xlu0 %v333, 17
      %v346 = vpop.permute.xlu0 %345
      %vm347 = vcmask 138240
      %v348 = vsel %vm347, %v342, %v344
      %v349 = vsel %vm347, %v344, %v346
      %v352 = vsel %vm336, %v348, 0.0
      %v353 = vsel %vm337, %v349, 0.0
      %354 = vst [vmem:[#allocation3] sm:$0xff] %v352
      %355 = vst [vmem:[#allocation3 + $0x8] sm:$0xff] %v353
      %v356 = vld [vmem:[#allocation2] sm:$0xff]
      %v357 = vld [vmem:[#allocation2 + $0x8] sm:$0xff]
      %v358 = vld [vmem:[#allocation2 + $0x10] sm:$0xff]
      %362 = vrot.lane.b32.xlu0 %v356, 16
      %v363 = vpop.permute.xlu0 %362
      %364 = vrot.lane.b32.xlu0 %v357, 16
      %v365 = vpop.permute.xlu0 %364
      %366 = vrot.lane.b32.xlu0 %v358, 16
      %v367 = vpop.permute.xlu0 %366
      %vm368 = vcmask 130048
      %v369 = vsel %vm368, %v363, %v365
      %v370 = vsel %vm368, %v365, %v367
      %373 = vst [vmem:[#allocation3 + $0x10] sm:$0xff] %v369
      %374 = vst [vmem:[#allocation3 + $0x18] sm:$0xff] %v370
      %v375 = vld [vmem:[#allocation2] sm:$0xff]
      %v376 = vld [vmem:[#allocation2 + $0x8] sm:$0xff]
      %v377 = vld [vmem:[#allocation2 + $0x10] sm:$0xff]
      %v378 = vsel %vm329, 1, 0
      %v379 = vsel %vm330, 1, 0
      %vm380 = vcmp.eq.s32.totalorder %v378, 1
      %vm381 = vcmp.eq.s32.totalorder %v379, 1
      %385 = vrot.lane.b32.xlu0 %v375, 15
      %v386 = vpop.permute.xlu0 %385
      %387 = vrot.lane.b32.xlu0 %v376, 15
      %v388 = vpop.permute.xlu0 %387
      %389 = vrot.lane.b32.xlu0 %v377, 15
      %v390 = vpop.permute.xlu0 %389
      %vm391 = vcmask 121856
      %v392 = vsel %vm391, %v386, %v388
      %v393 = vsel %vm391, %v388, %v390
      %v396 = vsel %vm380, %v392, 0.0
      %v397 = vsel %vm381, %v393, 0.0
      %398 = vst [vmem:[#allocation3 + $0x20] sm:$0xff] %v396
      %399 = vst [vmem:[#allocation3 + $0x28] sm:$0xff] %v397
      %v400 = vld [vmem:[#allocation2] sm:$0xff]
      %v401 = vld [vmem:[#allocation2 + $0x8] sm:$0xff]
      %v402 = vld [vmem:[#allocation2 + $0x10] sm:$0xff]
      %406 = vrot.lane.b32.xlu0 %v400, 1
      %v407 = vpop.permute.xlu0 %406
      %408 = vrot.lane.b32.xlu0 %v401, 1
      %v409 = vpop.permute.xlu0 %408
      %410 = vrot.lane.b32.xlu0 %v402, 1
      %v411 = vpop.permute.xlu0 %410
      %vm412 = vcmask 7168
      %v413 = vsel %vm412, %v407, %v409
      %v414 = vsel %vm412, %v409, %v411
      %v417 = vsel %vm336, %v413, 0.0
      %v418 = vsel %vm337, %v414, 0.0
      %419 = vst [vmem:[#allocation3 + $0x30] sm:$0xff] %v417
      %420 = vst [vmem:[#allocation3 + $0x38] sm:$0xff] %v418
      %v421 = vld [vmem:[#allocation2 + $0x8] sm:$0xff]
      %v422 = vld [vmem:[#allocation2 + $0x10] sm:$0xff]
      %423 = vst [vmem:[#allocation3 + $0x40] sm:$0xff] %v421
      %424 = vst [vmem:[#allocation3 + $0x48] sm:$0xff] %v422
      %v425 = vld [vmem:[#allocation2 + $0x8] sm:$0xff]
      %v426 = vld [vmem:[#allocation2 + $0x10] sm:$0xff]
      %v427 = vld [vmem:[#allocation2 + $0x18] sm:$0xff]
      %431 = vrot.lane.b32.xlu0 %v425, 127
      %v432 = vpop.permute.xlu0 %431
      %433 = vrot.lane.b32.xlu0 %v426, 127
      %v434 = vpop.permute.xlu0 %433
      %435 = vrot.lane.b32.xlu0 %v427, 127
      %v436 = vpop.permute.xlu0 %435
      %vm437 = vcmask 1039360
      %v438 = vsel %vm437, %v432, %v434
      %v439 = vsel %vm437, %v434, %v436
      %v442 = vsel %vm380, %v438, 0.0
      %v443 = vsel %vm381, %v439, 0.0
      %444 = vst [vmem:[#allocation3 + $0x50] sm:$0xff] %v442
      %445 = vst [vmem:[#allocation3 + $0x58] sm:$0xff] %v443
      %v446 = vld [vmem:[#allocation2 + $0x8] sm:$0xff]
      %v447 = vld [vmem:[#allocation2 + $0x10] sm:$0xff]
      %v448 = vld [vmem:[#allocation2 + $0x18] sm:$0xff]
      %452 = vrot.lane.b32.xlu0 %v446, 113
      %v453 = vpop.permute.xlu0 %452
      %454 = vrot.lane.b32.xlu0 %v447, 113
      %v455 = vpop.permute.xlu0 %454
      %456 = vrot.lane.b32.xlu0 %v448, 113
      %v457 = vpop.permute.xlu0 %456
      %vm458 = vcmask 924672
      %v459 = vsel %vm458, %v453, %v455
      %v460 = vsel %vm458, %v455, %v457
      %v463 = vsel %vm336, %v459, 0.0
      %v464 = vsel %vm337, %v460, 0.0
      %465 = vst [vmem:[#allocation3 + $0x60] sm:$0xff] %v463
      %466 = vst [vmem:[#allocation3 + $0x68] sm:$0xff] %v464
      %v467 = vld [vmem:[#allocation2 + $0x8] sm:$0xff]
      %v468 = vld [vmem:[#allocation2 + $0x10] sm:$0xff]
      %v469 = vld [vmem:[#allocation2 + $0x18] sm:$0xff]
      %473 = vrot.lane.b32.xlu0 %v467, 112
      %v474 = vpop.permute.xlu0 %473
      %475 = vrot.lane.b32.xlu0 %v468, 112
      %v476 = vpop.permute.xlu0 %475
      %477 = vrot.lane.b32.xlu0 %v469, 112
      %v478 = vpop.permute.xlu0 %477
      %vm479 = vcmask 916480
      %v480 = vsel %vm479, %v474, %v476
      %v481 = vsel %vm479, %v476, %v478
      %484 = vst [vmem:[#allocation3 + $0x70] sm:$0xff] %v480
      %485 = vst [vmem:[#allocation3 + $0x78] sm:$0xff] %v481
      %v486 = vld [vmem:[#allocation2 + $0x8] sm:$0xff]
      %v487 = vld [vmem:[#allocation2 + $0x10] sm:$0xff]
      %v488 = vld [vmem:[#allocation2 + $0x18] sm:$0xff]
      %492 = vrot.lane.b32.xlu0 %v486, 111
      %v493 = vpop.permute.xlu0 %492
      %494 = vrot.lane.b32.xlu0 %v487, 111
      %v495 = vpop.permute.xlu0 %494
      %496 = vrot.lane.b32.xlu0 %v488, 111
      %v497 = vpop.permute.xlu0 %496
      %vm498 = vcmask 908288
      %v499 = vsel %vm498, %v493, %v495
      %v500 = vsel %vm498, %v495, %v497
      %v503 = vsel %vm380, %v499, 0.0
      %v504 = vsel %vm381, %v500, 0.0
      %505 = vst [vmem:[#allocation3 + $0x80] sm:$0xff] %v503
      %506 = vst [vmem:[#allocation3 + $0x88] sm:$0xff] %v504
      %v507 = vld [vmem:[%s3] sm:$0xf]
      %v508 = vld [vmem:[#allocation3] sm:$0xff]
      %v509 = vld [vmem:[#allocation3 + $0x8] sm:$0xff]
      %v510 = vld [vmem:[#allocation3 + $0x10] sm:$0xff]
      %v511 = vld [vmem:[#allocation3 + $0x18] sm:$0xff]
      %v512 = vld [vmem:[#allocation3 + $0x20] sm:$0xff]
      %v513 = vld [vmem:[#allocation3 + $0x28] sm:$0xff]
      %v514 = vld [vmem:[#allocation3 + $0x30] sm:$0xff]
      %v515 = vld [vmem:[#allocation3 + $0x38] sm:$0xff]
      %v516 = vld [vmem:[#allocation3 + $0x40] sm:$0xff]
      %v517 = vld [vmem:[#allocation3 + $0x48] sm:$0xff]
      %v518 = vld [vmem:[#allocation3 + $0x50] sm:$0xff]
      %v519 = vld [vmem:[#allocation3 + $0x58] sm:$0xff]
      %v520 = vld [vmem:[#allocation3 + $0x60] sm:$0xff]
      %v521 = vld [vmem:[#allocation3 + $0x68] sm:$0xff]
      %v522 = vld [vmem:[#allocation3 + $0x70] sm:$0xff]
      %v523 = vld [vmem:[#allocation3 + $0x78] sm:$0xff]
      %v524 = vld [vmem:[#allocation3 + $0x80] sm:$0xff]
      %v525 = vld [vmem:[#allocation3 + $0x88] sm:$0xff]
      %v526 = vpack.c.bf16 %v510, %v508
      %v527 = vpack.c.bf16 %v511, %v509
      %v528 = vpack.c.bf16 %v514, %v512
      %v529 = vpack.c.bf16 %v515, %v513
      %v530 = vpack.c.bf16 %v518, %v516
      %v531 = vpack.c.bf16 %v519, %v517
      %v532 = vpack.c.bf16 %v522, %v520
      %v533 = vpack.c.bf16 %v523, %v521
      %v534 = vpack.c.bf16 %v524, %v524
      %v535 = vpack.c.bf16 %v525, %v525
      %vm536 = vcmask 588800
      %v538 = vsel %vm536, %v507, 0
      %vm540 = vcmask 1043456
      %v542 = vsel %vm540, %v534, 0
      %v545 = vsel %vm540, %v535, 0
      %547 = vmatprep.subr.bf16.mxu0 %v527
      %548 = vmatpush1.bf16.msra.mxu0 %v526
      %549 = vmatprep.subr.bf16.mxu0 %v529
      %550 = vmatpush1.bf16.msra.mxu0 %v528
      %551 = vmatprep.subr.bf16.mxu0 %v531
      %552 = vmatpush1.bf16.msra.mxu0 %v530
      %553 = vmatprep.subr.bf16.mxu0 %v533
      %554 = vmatpush1.bf16.msra.mxu0 %v532
      %555 = vmatprep.subr.bf16.mxu0 %v545
      %556 = vmatpush1.bf16.msra.mxu0 %v542
      %557 = vmatprep.subr.bf16.mxu0 0
      %558 = vmatpush1.bf16.msra.mxu0 0
      %559 = vmatprep.subr.bf16.mxu0 0
      %560 = vmatpush1.bf16.msra.mxu0 0
      %561 = vmatprep.subr.bf16.mxu0 0
      %562 = vmatpush1.bf16.msra.mxu0 0
      %563 = vmatprep.subr.bf16.mxu0 0
      %564 = vmatpush1.bf16.msra.mxu0 0
      %565 = vmatprep.subr.bf16.mxu0 0
      %566 = vmatpush1.bf16.msra.mxu0 0
      %567 = vmatprep.subr.bf16.mxu0 0
      %568 = vmatpush1.bf16.msra.mxu0 0
      %569 = vmatprep.subr.bf16.mxu0 0
      %570 = vmatpush1.bf16.msra.mxu0 0
      %571 = vmatprep.subr.bf16.mxu0 0
      %572 = vmatpush1.bf16.msra.mxu0 0
      %573 = vmatprep.subr.bf16.mxu0 0
      %574 = vmatpush1.bf16.msra.mxu0 0
      %575 = vmatprep.subr.bf16.mxu0 0
      %576 = vmatpush1.bf16.msra.mxu0 0
      %577 = vmatprep.subr.bf16.mxu0 0
      %578 = vmatpush1.bf16.msra.mxu0 0
      %579 = vmatprep.mubr.bf16.mxu0 0
      %580 = vmatmul.mubr.bf16.gmra.mrb[0].mxu0 %v538
      %v581 = vpop.f32.mrb[0].mxu0
      %v582 = vadd.f32 0.0, %v581
      %v583 = vpop.f32.mrb[0].mxu0
      %v584 = vadd.f32 0.0, %v583
      %v585 = vpop.f32.mrb[0].mxu0
      %v586 = vpop.f32.mrb[0].mxu0
      %587 = vdwg.mxu0
      %588 = vst [vmem:[%s264] sm:$0xff] %v582
      %589 = vst [vmem:[%s264 + $0x8] sm:$0xff] %v584
      %v590 = vadd.f32 %v582, %v584
      %591 = vadd.xlane.f32.xlu0 %v590
      %v592 = vpop.xlane.xlu0 %591
      %593 = vst.msk [vmem:[%s268] sm:$0xff] %vm412, %v592
      %v594 = vmul.f32 %v582, %v582
      %v595 = vmul.f32 %v584, %v584
      %v596 = vadd.f32 %v594, %v595
      %597 = vadd.xlane.f32.xlu0 %v596
      %v598 = vpop.xlane.xlu0 %597
      %599 = vst.msk [vmem:[%s272] sm:$0xff] %vm412, %v598
      %p600 = scmp.lt.s32.totalorder %s18, 1
      %s601 = scalar_select %p600, %s18, 1
      %s602 = smul.addr %s601, 2
      %s603 = smul.addr %s602, 8
      %s604 = scalar_lea.vmem %s4, %s603
      %p605 = scmp.lt.s32.totalorder %s18, 1
      %s606 = scalar_select %p605, %s18, 1
      %s607 = smul.addr %s606, 8
      %s608 = scalar_lea.vmem %s5, %s607
      %p609 = scmp.lt.s32.totalorder %s18, 1
      %s610 = scalar_select %p609, %s18, 1
      %s611 = smul.addr %s610, 8
      %s612 = scalar_lea.vmem %s6, %s611
      // Predicated region
      $region37: #{rrcnn_block_forward.8} parent=35 // pred_check
        %p613 = pneg %p125
      $region38: #{rrcnn_block_forward.8} parent=35 // pred_check_branch
        %615 = sbr.rel (%p613) target = $region40
      $region39: #{rrcnn_block_forward.8} parent=35 // pred_region
        _
      $region40: #{rrcnn_block_forward.8} parent=35 // pred_fallthru
        _
      // Predicated region
      $region41: #{rrcnn_block_forward.8} parent=35 // pred_check
        %p616 = pneg %p151
      $region42: #{rrcnn_block_forward.8} parent=35 // pred_check_branch
        %618 = sbr.rel (%p616) target = $region44
      $region43: #{rrcnn_block_forward.8} parent=35 // pred_region
        _
      $region44: #{rrcnn_block_forward.8} parent=35 // pred_fallthru
        _
      // Predicated region
      $region45: #{rrcnn_block_forward.8} parent=35 // pred_check
        %p619 = pneg %p177
      $region46: #{rrcnn_block_forward.8} parent=35 // pred_check_branch
        %621 = sbr.rel (%p619) target = $region48
      $region47: #{rrcnn_block_forward.8} parent=35 // pred_region
        _
      $region48: #{rrcnn_block_forward.8} parent=35 // pred_fallthru
        _
    $region36: #{rrcnn_block_forward.8} parent=5 // pred_fallthru
      _
    %p622 = scmp.le.s32.totalorder 2, %s13
    // Predicated region
    $region49: #{rrcnn_block_forward.8} parent=5 // pred_check
      %p623 = pneg %p622
    $region50: #{rrcnn_block_forward.8} parent=5 // pred_check_branch
      %625 = sbr.rel (%p623) target = $region52
    $region51: #{rrcnn_block_forward.8} parent=5 // pred_region
      %s626 = ssub.s32 %s13, 2
      // Predicated region
      $region53: #{rrcnn_block_forward.8} parent=51 // pred_check
        %p627 = pneg %p131
      $region54: #{rrcnn_block_forward.8} parent=51 // pred_check_branch
        %629 = sbr.rel (%p627) target = $region56
      $region55: #{rrcnn_block_forward.8} parent=51 // pred_region
        %p630 = scmp.lt.s32.totalorder %s19, 1
        %s631 = scalar_select %p630, %s19, 1
        %s632 = smul.addr %s631, 2
        %s633 = smul.addr %s632, 8
        %s634 = scalar_lea.vmem %s4, %s633
      $region56: #{rrcnn_block_forward.8} parent=51 // pred_fallthru
        _
      // Predicated region
      $region57: #{rrcnn_block_forward.8} parent=51 // pred_check
        %p635 = pneg %p157
      $region58: #{rrcnn_block_forward.8} parent=51 // pred_check_branch
        %637 = sbr.rel (%p635) target = $region60
      $region59: #{rrcnn_block_forward.8} parent=51 // pred_region
        %p638 = scmp.lt.s32.totalorder %s19, 1
        %s639 = scalar_select %p638, %s19, 1
        %s640 = smul.addr %s639, 8
        %s641 = scalar_lea.vmem %s5, %s640
      $region60: #{rrcnn_block_forward.8} parent=51 // pred_fallthru
        _
      // Predicated region
      $region61: #{rrcnn_block_forward.8} parent=51 // pred_check
        %p642 = pneg %p183
      $region62: #{rrcnn_block_forward.8} parent=51 // pred_check_branch
        %644 = sbr.rel (%p642) target = $region64
      $region63: #{rrcnn_block_forward.8} parent=51 // pred_region
        %p645 = scmp.lt.s32.totalorder %s19, 1
        %s646 = scalar_select %p645, %s19, 1
        %s647 = smul.addr %s646, 8
        %s648 = scalar_lea.vmem %s6, %s647
      $region64: #{rrcnn_block_forward.8} parent=51 // pred_fallthru
        _
    $region52: #{rrcnn_block_forward.8} parent=5 // pred_fallthru
      _
  $region6: #{rrcnn_block_forward.8} parent=0 // loop_footer
    %s17 = sadd.s32 1, %s13
  $region7: #{rrcnn_block_forward.8} parent=0 // loop_footer_branch
    %12 = sbr.rel target = $region3
  $region8: #{rrcnn_block_forward.8} parent=0 // loop_exit
    _

</llo_original>
